<compile_context>
chip_gen: v6e
topology: v6e:2x2x1
jax: 0.10.0
libtpu: 0.0.40
codegen_flags: <defaults>
</compile_context>

<pallas_src>
import jax
import jax.numpy as jnp
from jax.experimental import pallas as pl
from jax.experimental.pallas import tpu as pltpu


# ----------------------------- Pallas kernel ------------------------------ #
def fused_critic_kernel(states_ref, actions_ref,
                        wih_ref, whh_ref, b_ref,
                        wa1_ref, ba1_ref, wa2_ref, ba2_ref,
                        wq1s_ref, wq1a_ref, bq1_ref, wq2_ref, bq2_ref,
                        q_ref):
    f32 = jnp.float32
    TB = states_ref.shape[0]          # time-major flattened states: (T*B, F)
    B = actions_ref.shape[0]
    T = TB // B
    H2 = whh_ref.shape[0]             # 2H  (both critics side by side)
    Q = bq1_ref.shape[1] // 2         # per-critic Q-net hidden width

    x = states_ref[...]               # (T*B, F)
    a = actions_ref[...]              # (B, A)
    whh = whh_ref[...]                # (2H, 8H) block-diagonal, gate-interleaved

    # ---- hoisted input projection: ONE matmul for both critics, bias folded ----
    # Columns ordered [i1 i2 | f1 f2 | g1 g2 | o1 o2], each block H wide.
    xproj = jnp.dot(x, wih_ref[...], preferred_element_type=f32) + b_ref[...]   # (T*B, 8H)

    h = jnp.zeros((B, H2), f32)       # [h1 | h2]
    c = jnp.zeros((B, H2), f32)       # [c1 | c2]

    # Fully unrolled recurrence; one MXU matmul + fused gate math per step,
    # covering BOTH critics.
    for t in range(T):
        pre = xproj[t * B:(t + 1) * B, :] + jnp.dot(h, whh,
                                                    preferred_element_type=f32)  # (B, 8H)
        i = jax.nn.sigmoid(pre[:, 0 * H2:1 * H2])
        f = jax.nn.sigmoid(pre[:, 1 * H2:2 * H2])
        g = jnp.tanh(pre[:, 2 * H2:3 * H2])
        o = jax.nn.sigmoid(pre[:, 3 * H2:4 * H2])
        c = f * c + i * g
        h = o * jnp.tanh(c)

    # ---- action net (shared input, concatenated / block-diag weights) ---------
    la = jnp.maximum(jnp.dot(a, wa1_ref[...], preferred_element_type=f32)
                     + ba1_ref[...], 0.0)                        # (B, 2*h1)
    la = jnp.maximum(jnp.dot(la, wa2_ref[...], preferred_element_type=f32)
                     + ba2_ref[...], 0.0)                        # (B, 2*h2)
    la = jnp.tanh(la)                                            # squash_output

    # ---- shared Q net, both critics in disjoint lane ranges -------------------
    z = jnp.maximum(jnp.dot(h, wq1s_ref[...], preferred_element_type=f32)
                    + jnp.dot(la, wq1a_ref[...], preferred_element_type=f32)
                    + bq1_ref[...], 0.0)                         # (B, 2Q) = one vreg row

    # Final 1-wide heads: elementwise mul + lane reductions (XLU), no skinny matmul.
    prod = z * wq2_ref[...]                                      # (B, 2Q)
    q1 = jnp.sum(prod[:, :Q], axis=1, keepdims=True)             # (B, 1)
    q2 = jnp.sum(prod[:, Q:], axis=1, keepdims=True)             # (B, 1)
    q_ref[...] = jnp.tanh(jnp.concatenate([q1, q2], axis=1) + bq2_ref[...])  # (B, 2)


# ------------------------- wrapper-side weight packing ---------------------- #
def _block_diag(a, b):
    m, n = a.shape
    p, q = b.shape
    top = jnp.concatenate([a, jnp.zeros((m, q), a.dtype)], axis=1)
    bot = jnp.concatenate([jnp.zeros((p, n), b.dtype), b], axis=1)
    return jnp.concatenate([top, bot], axis=0)


def _pack_params(params_qf1, params_qf2):
    (wih1, whh1, b1, wa1_1, ba1_1, wa2_1, ba2_1,
     wq1s_1, wq1a_1, bq1_1, wq2_1, bq2_1) = params_qf1
    (wih2, whh2, b2, wa1_2, ba1_2, wa2_2, ba2_2,
     wq1s_2, wq1a_2, bq1_2, wq2_2, bq2_2) = params_qf2

    H = whh1.shape[0]

    def interleave_gates(w1, w2):
        # (..., 4H) x2  ->  (..., 8H) with columns [i1 i2 f1 f2 g1 g2 o1 o2]
        r1 = w1.reshape(*w1.shape[:-1], 4, H)
        r2 = w2.reshape(*w2.shape[:-1], 4, H)
        return jnp.stack([r1, r2], axis=-2).reshape(*w1.shape[:-1], 8 * H)

    wih_cat = interleave_gates(wih1, wih2)                       # (F, 8H)
    b_cat = interleave_gates(b1, b2)                             # (1, 8H)

    # Block-diagonal recurrent matrix with the same gate-interleaved column order.
    r1 = whh1.reshape(H, 4, H)
    r2 = whh2.reshape(H, 4, H)
    zz = jnp.zeros_like(r1)
    top = jnp.stack([r1, zz], axis=2).reshape(H, 8 * H)          # h1 -> critic-1 cols
    bot = jnp.stack([zz, r2], axis=2).reshape(H, 8 * H)          # h2 -> critic-2 cols
    whh_blk = jnp.concatenate([top, bot], axis=0)                # (2H, 8H)

    wa1_cat = jnp.concatenate([wa1_1, wa1_2], axis=1)            # (A, 2*h1) shared input
    ba1_cat = jnp.concatenate([ba1_1, ba1_2], axis=1)
    wa2_blk = _block_diag(wa2_1, wa2_2)                          # (2*h1, 2*h2)
    ba2_cat = jnp.concatenate([ba2_1, ba2_2], axis=1)
    wq1s_blk = _block_diag(wq1s_1, wq1s_2)                       # (2H, 2Q)
    wq1a_blk = _block_diag(wq1a_1, wq1a_2)                       # (2*h2, 2Q)
    bq1_cat = jnp.concatenate([bq1_1, bq1_2], axis=1)            # (1, 2Q)
    wq2_cat = jnp.concatenate([wq2_1, wq2_2], axis=1)            # (1, 2Q)
    bq2_cat = jnp.concatenate([bq2_1, bq2_2], axis=1)            # (1, 2)

    return (wih_cat, whh_blk, b_cat, wa1_cat, ba1_cat, wa2_blk, ba2_cat,
            wq1s_blk, wq1a_blk, bq1_cat, wq2_cat, bq2_cat)


# ------------------------------ JAX wrapper -------------------------------- #
@jax.jit
def critic_forward(obs, actions, params_qf1, params_qf2):
    """Fused forward of both critics. obs: (B, T, C, H, W); actions: (B, A)."""
    B, T = obs.shape[0], obs.shape[1]
    states = obs.reshape(B, T, -1)                               # flatten(start_dim=2)
    # Time-major rows so each LSTM step reads a contiguous static slice.
    states_tm = jnp.transpose(states, (1, 0, 2)).reshape(T * B, -1)

    packed = _pack_params(params_qf1, params_qf2)

    vmem = pl.BlockSpec(memory_space=pltpu.MemorySpace.VMEM)
    q = pl.pallas_call(
        fused_critic_kernel,
        out_shape=jax.ShapeDtypeStruct((B, 2), jnp.float32),
        in_specs=[vmem] * (2 + len(packed)),
        out_specs=vmem,
    )(states_tm, actions, *packed)
    return q[:, 0:1], q[:, 1:2]                                  # (q1, q2), each (B, 1)


# ------------------------- pure-JAX reference (one critic) ------------------ #
def critic_ref(obs, actions, params):
    wih, whh, b, wa1, ba1, wa2, ba2, wq1s, wq1a, bq1, wq2row, bq2 = params
    B, T = obs.shape[0], obs.shape[1]
    x = obs.reshape(B, T, -1)
    H = whh.shape[0]
    h = jnp.zeros((B, H), jnp.float32)
    c = jnp.zeros((B, H), jnp.float32)
    for t in range(T):
        pre = x[:, t] @ wih + b + h @ whh
        i = jax.nn.sigmoid(pre[:, :H])
        f = jax.nn.sigmoid(pre[:, H:2 * H])
        g = jnp.tanh(pre[:, 2 * H:3 * H])
        o = jax.nn.sigmoid(pre[:, 3 * H:])
        c = f * c + i * g
        h = o * jnp.tanh(c)
    la = jnp.maximum(actions @ wa1 + ba1, 0.0)
    la = jnp.maximum(la @ wa2 + ba2, 0.0)
    la = jnp.tanh(la)
    z = jnp.maximum(h @ wq1s + la @ wq1a + bq1, 0.0)
    return jnp.tanh(z @ wq2row.T + bq2)


# --------------------------- deterministic init ----------------------------- #
def _uniform(key, shape, bound):
    return jax.random.uniform(key, shape, jnp.float32, -bound, bound)


def _init_linear(key, fan_in, fan_out):
    k1, k2 = jax.random.split(key)
    bound = 1.0 / (fan_in ** 0.5)
    return _uniform(k1, (fan_in, fan_out), bound), _uniform(k2, (1, fan_out), bound)


def init_critic_params(key, features_dim, hidden_size, action_dim,
                       net_arch_action, net_arch):
    """One critic's parameters, laid out (in, out) for the fused kernel."""
    F, H, A = features_dim, hidden_size, action_dim
    h1, h2 = net_arch_action
    Q = net_arch[0]
    keys = jax.random.split(key, 9)
    kb = 1.0 / (H ** 0.5)
    # LSTM (num_layers=1), gates packed column-wise in PyTorch order [i | f | g | o].
    wih = _uniform(keys[0], (F, 4 * H), kb)                       # (F, 4H)
    whh = _uniform(keys[1], (H, 4 * H), kb)                       # (H, 4H)
    b = _uniform(keys[2], (1, 4 * H), kb) + _uniform(keys[3], (1, 4 * H), kb)  # b_ih + b_hh
    # action_net MLP (net_arch_action = [h1, h2]), ReLU + ReLU + Tanh.
    wa1, ba1 = _init_linear(keys[4], A, h1)
    wa2, ba2 = _init_linear(keys[5], h1, h2)
    # q_net MLP (net_arch = [Q]); first layer split over [latent_state | latent_action].
    wq1, bq1 = _init_linear(keys[6], H + h2, Q)
    wq1s, wq1a = wq1[:H], wq1[H:]
    wq2, bq2 = _init_linear(keys[7], Q, 1)
    wq2row = wq2.T                                                # (1, Q)
    return (wih, whh, b, wa1, ba1, wa2, ba2, wq1s, wq1a, bq1, wq2row, bq2)


# ---------------------------------- main ------------------------------------ #
if __name__ == "__main__":
    # Small shapes consistent with the module.
    B, T = 2, 8                    # batch, sequence length
    C, HS, WS = 4, 4, 4            # per-timestep observation is (C, H, W)
    features_dim = C * HS * WS     # flatten(start_dim=2) -> 64
    hidden_size = 32               # LSTM hidden (2 critics * 4H = 256 lanes)
    action_dim = 6
    net_arch_action = [32, 16]
    net_arch = [64]                # 2 critics * Q = 128 lanes = one vreg

    root = jax.random.PRNGKey(0)
    k_obs, k_act, k_p1, k_p2 = jax.random.split(root, 4)

    obs = jax.random.normal(k_obs, (B, T, C, HS, WS), jnp.float32)
    actions = jax.random.normal(k_act, (B, action_dim), jnp.float32)

    params_qf1 = init_critic_params(k_p1, features_dim, hidden_size, action_dim,
                                    net_arch_action, net_arch)
    params_qf2 = init_critic_params(k_p2, features_dim, hidden_size, action_dim,
                                    net_arch_action, net_arch)

    q1, q2 = critic_forward(obs, actions, params_qf1, params_qf2)
    jax.block_until_ready((q1, q2))
    assert q1.shape == (B, 1) and q2.shape == (B, 1)

    # Pure-JAX reference check (structure / packing correctness).
    q1_ref = critic_ref(obs, actions, params_qf1)
    q2_ref = critic_ref(obs, actions, params_qf2)
    err = max(float(jnp.max(jnp.abs(q1 - q1_ref))),
              float(jnp.max(jnp.abs(q2 - q2_ref))))
    assert err < 2e-3, f"mismatch vs reference: {err}"

    print("KERNEL_OK")
</pallas_src>

<mosaic_0001>
module attributes {stable_mosaic.version = 11 : i64} {
  func.func @fused_critic_kernel(%arg0: memref<16x64xf32, #tpu.memory_space<vmem>>, %arg1: memref<2x6xf32, #tpu.memory_space<vmem>>, %arg2: memref<64x256xf32, #tpu.memory_space<vmem>>, %arg3: memref<64x256xf32, #tpu.memory_space<vmem>>, %arg4: memref<1x256xf32, #tpu.memory_space<vmem>>, %arg5: memref<6x64xf32, #tpu.memory_space<vmem>>, %arg6: memref<1x64xf32, #tpu.memory_space<vmem>>, %arg7: memref<64x32xf32, #tpu.memory_space<vmem>>, %arg8: memref<1x32xf32, #tpu.memory_space<vmem>>, %arg9: memref<64x128xf32, #tpu.memory_space<vmem>>, %arg10: memref<32x128xf32, #tpu.memory_space<vmem>>, %arg11: memref<1x128xf32, #tpu.memory_space<vmem>>, %arg12: memref<1x128xf32, #tpu.memory_space<vmem>>, %arg13: memref<1x2xf32, #tpu.memory_space<vmem>>, %arg14: memref<2x2xf32, #tpu.memory_space<vmem>>) attributes {dimension_semantics = [], scalar_prefetch = 0 : i64, scratch_operands = 0 : i64, tpu.core_type = #tpu.core_type<tc>} {
    %c0 = arith.constant 0 : index
    %c0_0 = arith.constant 0 : index
    %0 = vector.load %arg0[%c0, %c0_0] : memref<16x64xf32, #tpu.memory_space<vmem>>, vector<16x64xf32>
    %c0_1 = arith.constant 0 : index
    %c0_2 = arith.constant 0 : index
    %1 = vector.load %arg1[%c0_1, %c0_2] : memref<2x6xf32, #tpu.memory_space<vmem>>, vector<2x6xf32>
    %c0_3 = arith.constant 0 : index
    %c0_4 = arith.constant 0 : index
    %2 = vector.load %arg3[%c0_3, %c0_4] : memref<64x256xf32, #tpu.memory_space<vmem>>, vector<64x256xf32>
    %c0_5 = arith.constant 0 : index
    %c0_6 = arith.constant 0 : index
    %3 = vector.load %arg2[%c0_5, %c0_6] : memref<64x256xf32, #tpu.memory_space<vmem>>, vector<64x256xf32>
    %cst = arith.constant dense<0.000000e+00> : vector<16x256xf32>
    %4 = tpu.matmul %0, %3, %cst {dimension_numbers = #tpu.dot_dimension_numbers<[1], [0], [0], [1], [0, 0, 1, 1], [], []>} : vector<16x64xf32>, vector<64x256xf32>, vector<16x256xf32> -> vector<16x256xf32>
    %c0_7 = arith.constant 0 : index
    %c0_8 = arith.constant 0 : index
    %5 = vector.load %arg4[%c0_7, %c0_8] : memref<1x256xf32, #tpu.memory_space<vmem>>, vector<1x256xf32>
    %6 = vector.broadcast %5 : vector<1x256xf32> to vector<16x256xf32>
    %7 = arith.addf %4, %6 : vector<16x256xf32>
    %cst_9 = arith.constant 0.000000e+00 : f32
    %8 = vector.broadcast %cst_9 : f32 to vector<2x64xf32>
    %cst_10 = arith.constant 0.000000e+00 : f32
    %9 = vector.broadcast %cst_10 : f32 to vector<2x64xf32>
    %10 = vector.extract_strided_slice %7 {offsets = [0, 0], sizes = [2, 256], strides = [1, 1]} : vector<16x256xf32> to vector<2x256xf32>
    %cst_11 = arith.constant dense<0.000000e+00> : vector<2x256xf32>
    %11 = tpu.matmul %8, %2, %cst_11 {dimension_numbers = #tpu.dot_dimension_numbers<[1], [0], [0], [1], [0, 0, 1, 1], [], []>} : vector<2x64xf32>, vector<64x256xf32>, vector<2x256xf32> -> vector<2x256xf32>
    %12 = arith.addf %10, %11 : vector<2x256xf32>
    %13 = vector.extract_strided_slice %12 {offsets = [0, 0], sizes = [2, 64], strides = [1, 1]} : vector<2x256xf32> to vector<2x64xf32>
    %14 = arith.negf %13 : vector<2x64xf32>
    %15 = math.exp %14 : vector<2x64xf32>
    %cst_12 = arith.constant 1.000000e+00 : f32
    %16 = vector.broadcast %cst_12 : f32 to vector<2x64xf32>
    %17 = arith.addf %16, %15 : vector<2x64xf32>
    %18 = arith.divf %16, %17 : vector<2x64xf32>
    %19 = vector.extract_strided_slice %12 {offsets = [0, 64], sizes = [2, 64], strides = [1, 1]} : vector<2x256xf32> to vector<2x64xf32>
    %20 = arith.negf %19 : vector<2x64xf32>
    %21 = math.exp %20 : vector<2x64xf32>
    %cst_13 = arith.constant 1.000000e+00 : f32
    %22 = vector.broadcast %cst_13 : f32 to vector<2x64xf32>
    %23 = arith.addf %22, %21 : vector<2x64xf32>
    %24 = arith.divf %22, %23 : vector<2x64xf32>
    %25 = vector.extract_strided_slice %12 {offsets = [0, 128], sizes = [2, 64], strides = [1, 1]} : vector<2x256xf32> to vector<2x64xf32>
    %26 = math.tanh %25 : vector<2x64xf32>
    %27 = vector.extract_strided_slice %12 {offsets = [0, 192], sizes = [2, 64], strides = [1, 1]} : vector<2x256xf32> to vector<2x64xf32>
    %28 = arith.negf %27 : vector<2x64xf32>
    %29 = math.exp %28 : vector<2x64xf32>
    %cst_14 = arith.constant 1.000000e+00 : f32
    %30 = vector.broadcast %cst_14 : f32 to vector<2x64xf32>
    %31 = arith.addf %30, %29 : vector<2x64xf32>
    %32 = arith.divf %30, %31 : vector<2x64xf32>
    %33 = arith.mulf %24, %9 : vector<2x64xf32>
    %34 = arith.mulf %18, %26 : vector<2x64xf32>
    %35 = arith.addf %33, %34 : vector<2x64xf32>
    %36 = math.tanh %35 : vector<2x64xf32>
    %37 = arith.mulf %32, %36 : vector<2x64xf32>
    %38 = vector.extract_strided_slice %7 {offsets = [2, 0], sizes = [2, 256], strides = [1, 1]} : vector<16x256xf32> to vector<2x256xf32>
    %cst_15 = arith.constant dense<0.000000e+00> : vector<2x256xf32>
    %39 = tpu.matmul %37, %2, %cst_15 {dimension_numbers = #tpu.dot_dimension_numbers<[1], [0], [0], [1], [0, 0, 1, 1], [], []>} : vector<2x64xf32>, vector<64x256xf32>, vector<2x256xf32> -> vector<2x256xf32>
    %40 = arith.addf %38, %39 : vector<2x256xf32>
    %41 = vector.extract_strided_slice %40 {offsets = [0, 0], sizes = [2, 64], strides = [1, 1]} : vector<2x256xf32> to vector<2x64xf32>
    %42 = arith.negf %41 : vector<2x64xf32>
    %43 = math.exp %42 : vector<2x64xf32>
    %cst_16 = arith.constant 1.000000e+00 : f32
    %44 = vector.broadcast %cst_16 : f32 to vector<2x64xf32>
    %45 = arith.addf %44, %43 : vector<2x64xf32>
    %46 = arith.divf %44, %45 : vector<2x64xf32>
    %47 = vector.extract_strided_slice %40 {offsets = [0, 64], sizes = [2, 64], strides = [1, 1]} : vector<2x256xf32> to vector<2x64xf32>
    %48 = arith.negf %47 : vector<2x64xf32>
    %49 = math.exp %48 : vector<2x64xf32>
    %cst_17 = arith.constant 1.000000e+00 : f32
    %50 = vector.broadcast %cst_17 : f32 to vector<2x64xf32>
    %51 = arith.addf %50, %49 : vector<2x64xf32>
    %52 = arith.divf %50, %51 : vector<2x64xf32>
    %53 = vector.extract_strided_slice %40 {offsets = [0, 128], sizes = [2, 64], strides = [1, 1]} : vector<2x256xf32> to vector<2x64xf32>
    %54 = math.tanh %53 : vector<2x64xf32>
    %55 = vector.extract_strided_slice %40 {offsets = [0, 192], sizes = [2, 64], strides = [1, 1]} : vector<2x256xf32> to vector<2x64xf32>
    %56 = arith.negf %55 : vector<2x64xf32>
    %57 = math.exp %56 : vector<2x64xf32>
    %cst_18 = arith.constant 1.000000e+00 : f32
    %58 = vector.broadcast %cst_18 : f32 to vector<2x64xf32>
    %59 = arith.addf %58, %57 : vector<2x64xf32>
    %60 = arith.divf %58, %59 : vector<2x64xf32>
    %61 = arith.mulf %52, %35 : vector<2x64xf32>
    %62 = arith.mulf %46, %54 : vector<2x64xf32>
    %63 = arith.addf %61, %62 : vector<2x64xf32>
    %64 = math.tanh %63 : vector<2x64xf32>
    %65 = arith.mulf %60, %64 : vector<2x64xf32>
    %66 = vector.extract_strided_slice %7 {offsets = [4, 0], sizes = [2, 256], strides = [1, 1]} : vector<16x256xf32> to vector<2x256xf32>
    %cst_19 = arith.constant dense<0.000000e+00> : vector<2x256xf32>
    %67 = tpu.matmul %65, %2, %cst_19 {dimension_numbers = #tpu.dot_dimension_numbers<[1], [0], [0], [1], [0, 0, 1, 1], [], []>} : vector<2x64xf32>, vector<64x256xf32>, vector<2x256xf32> -> vector<2x256xf32>
    %68 = arith.addf %66, %67 : vector<2x256xf32>
    %69 = vector.extract_strided_slice %68 {offsets = [0, 0], sizes = [2, 64], strides = [1, 1]} : vector<2x256xf32> to vector<2x64xf32>
    %70 = arith.negf %69 : vector<2x64xf32>
    %71 = math.exp %70 : vector<2x64xf32>
    %cst_20 = arith.constant 1.000000e+00 : f32
    %72 = vector.broadcast %cst_20 : f32 to vector<2x64xf32>
    %73 = arith.addf %72, %71 : vector<2x64xf32>
    %74 = arith.divf %72, %73 : vector<2x64xf32>
    %75 = vector.extract_strided_slice %68 {offsets = [0, 64], sizes = [2, 64], strides = [1, 1]} : vector<2x256xf32> to vector<2x64xf32>
    %76 = arith.negf %75 : vector<2x64xf32>
    %77 = math.exp %76 : vector<2x64xf32>
    %cst_21 = arith.constant 1.000000e+00 : f32
    %78 = vector.broadcast %cst_21 : f32 to vector<2x64xf32>
    %79 = arith.addf %78, %77 : vector<2x64xf32>
    %80 = arith.divf %78, %79 : vector<2x64xf32>
    %81 = vector.extract_strided_slice %68 {offsets = [0, 128], sizes = [2, 64], strides = [1, 1]} : vector<2x256xf32> to vector<2x64xf32>
    %82 = math.tanh %81 : vector<2x64xf32>
    %83 = vector.extract_strided_slice %68 {offsets = [0, 192], sizes = [2, 64], strides = [1, 1]} : vector<2x256xf32> to vector<2x64xf32>
    %84 = arith.negf %83 : vector<2x64xf32>
    %85 = math.exp %84 : vector<2x64xf32>
    %cst_22 = arith.constant 1.000000e+00 : f32
    %86 = vector.broadcast %cst_22 : f32 to vector<2x64xf32>
    %87 = arith.addf %86, %85 : vector<2x64xf32>
    %88 = arith.divf %86, %87 : vector<2x64xf32>
    %89 = arith.mulf %80, %63 : vector<2x64xf32>
    %90 = arith.mulf %74, %82 : vector<2x64xf32>
    %91 = arith.addf %89, %90 : vector<2x64xf32>
    %92 = math.tanh %91 : vector<2x64xf32>
    %93 = arith.mulf %88, %92 : vector<2x64xf32>
    %94 = vector.extract_strided_slice %7 {offsets = [6, 0], sizes = [2, 256], strides = [1, 1]} : vector<16x256xf32> to vector<2x256xf32>
    %cst_23 = arith.constant dense<0.000000e+00> : vector<2x256xf32>
    %95 = tpu.matmul %93, %2, %cst_23 {dimension_numbers = #tpu.dot_dimension_numbers<[1], [0], [0], [1], [0, 0, 1, 1], [], []>} : vector<2x64xf32>, vector<64x256xf32>, vector<2x256xf32> -> vector<2x256xf32>
    %96 = arith.addf %94, %95 : vector<2x256xf32>
    %97 = vector.extract_strided_slice %96 {offsets = [0, 0], sizes = [2, 64], strides = [1, 1]} : vector<2x256xf32> to vector<2x64xf32>
    %98 = arith.negf %97 : vector<2x64xf32>
    %99 = math.exp %98 : vector<2x64xf32>
    %cst_24 = arith.constant 1.000000e+00 : f32
    %100 = vector.broadcast %cst_24 : f32 to vector<2x64xf32>
    %101 = arith.addf %100, %99 : vector<2x64xf32>
    %102 = arith.divf %100, %101 : vector<2x64xf32>
    %103 = vector.extract_strided_slice %96 {offsets = [0, 64], sizes = [2, 64], strides = [1, 1]} : vector<2x256xf32> to vector<2x64xf32>
    %104 = arith.negf %103 : vector<2x64xf32>
    %105 = math.exp %104 : vector<2x64xf32>
    %cst_25 = arith.constant 1.000000e+00 : f32
    %106 = vector.broadcast %cst_25 : f32 to vector<2x64xf32>
    %107 = arith.addf %106, %105 : vector<2x64xf32>
    %108 = arith.divf %106, %107 : vector<2x64xf32>
    %109 = vector.extract_strided_slice %96 {offsets = [0, 128], sizes = [2, 64], strides = [1, 1]} : vector<2x256xf32> to vector<2x64xf32>
    %110 = math.tanh %109 : vector<2x64xf32>
    %111 = vector.extract_strided_slice %96 {offsets = [0, 192], sizes = [2, 64], strides = [1, 1]} : vector<2x256xf32> to vector<2x64xf32>
    %112 = arith.negf %111 : vector<2x64xf32>
    %113 = math.exp %112 : vector<2x64xf32>
    %cst_26 = arith.constant 1.000000e+00 : f32
    %114 = vector.broadcast %cst_26 : f32 to vector<2x64xf32>
    %115 = arith.addf %114, %113 : vector<2x64xf32>
    %116 = arith.divf %114, %115 : vector<2x64xf32>
    %117 = arith.mulf %108, %91 : vector<2x64xf32>
    %118 = arith.mulf %102, %110 : vector<2x64xf32>
    %119 = arith.addf %117, %118 : vector<2x64xf32>
    %120 = math.tanh %119 : vector<2x64xf32>
    %121 = arith.mulf %116, %120 : vector<2x64xf32>
    %122 = vector.extract_strided_slice %7 {offsets = [8, 0], sizes = [2, 256], strides = [1, 1]} : vector<16x256xf32> to vector<2x256xf32>
    %cst_27 = arith.constant dense<0.000000e+00> : vector<2x256xf32>
    %123 = tpu.matmul %121, %2, %cst_27 {dimension_numbers = #tpu.dot_dimension_numbers<[1], [0], [0], [1], [0, 0, 1, 1], [], []>} : vector<2x64xf32>, vector<64x256xf32>, vector<2x256xf32> -> vector<2x256xf32>
    %124 = arith.addf %122, %123 : vector<2x256xf32>
    %125 = vector.extract_strided_slice %124 {offsets = [0, 0], sizes = [2, 64], strides = [1, 1]} : vector<2x256xf32> to vector<2x64xf32>
    %126 = arith.negf %125 : vector<2x64xf32>
    %127 = math.exp %126 : vector<2x64xf32>
    %cst_28 = arith.constant 1.000000e+00 : f32
    %128 = vector.broadcast %cst_28 : f32 to vector<2x64xf32>
    %129 = arith.addf %128, %127 : vector<2x64xf32>
    %130 = arith.divf %128, %129 : vector<2x64xf32>
    %131 = vector.extract_strided_slice %124 {offsets = [0, 64], sizes = [2, 64], strides = [1, 1]} : vector<2x256xf32> to vector<2x64xf32>
    %132 = arith.negf %131 : vector<2x64xf32>
    %133 = math.exp %132 : vector<2x64xf32>
    %cst_29 = arith.constant 1.000000e+00 : f32
    %134 = vector.broadcast %cst_29 : f32 to vector<2x64xf32>
    %135 = arith.addf %134, %133 : vector<2x64xf32>
    %136 = arith.divf %134, %135 : vector<2x64xf32>
    %137 = vector.extract_strided_slice %124 {offsets = [0, 128], sizes = [2, 64], strides = [1, 1]} : vector<2x256xf32> to vector<2x64xf32>
    %138 = math.tanh %137 : vector<2x64xf32>
    %139 = vector.extract_strided_slice %124 {offsets = [0, 192], sizes = [2, 64], strides = [1, 1]} : vector<2x256xf32> to vector<2x64xf32>
    %140 = arith.negf %139 : vector<2x64xf32>
    %141 = math.exp %140 : vector<2x64xf32>
    %cst_30 = arith.constant 1.000000e+00 : f32
    %142 = vector.broadcast %cst_30 : f32 to vector<2x64xf32>
    %143 = arith.addf %142, %141 : vector<2x64xf32>
    %144 = arith.divf %142, %143 : vector<2x64xf32>
    %145 = arith.mulf %136, %119 : vector<2x64xf32>
    %146 = arith.mulf %130, %138 : vector<2x64xf32>
    %147 = arith.addf %145, %146 : vector<2x64xf32>
    %148 = math.tanh %147 : vector<2x64xf32>
    %149 = arith.mulf %144, %148 : vector<2x64xf32>
    %150 = vector.extract_strided_slice %7 {offsets = [10, 0], sizes = [2, 256], strides = [1, 1]} : vector<16x256xf32> to vector<2x256xf32>
    %cst_31 = arith.constant dense<0.000000e+00> : vector<2x256xf32>
    %151 = tpu.matmul %149, %2, %cst_31 {dimension_numbers = #tpu.dot_dimension_numbers<[1], [0], [0], [1], [0, 0, 1, 1], [], []>} : vector<2x64xf32>, vector<64x256xf32>, vector<2x256xf32> -> vector<2x256xf32>
    %152 = arith.addf %150, %151 : vector<2x256xf32>
    %153 = vector.extract_strided_slice %152 {offsets = [0, 0], sizes = [2, 64], strides = [1, 1]} : vector<2x256xf32> to vector<2x64xf32>
    %154 = arith.negf %153 : vector<2x64xf32>
    %155 = math.exp %154 : vector<2x64xf32>
    %cst_32 = arith.constant 1.000000e+00 : f32
    %156 = vector.broadcast %cst_32 : f32 to vector<2x64xf32>
    %157 = arith.addf %156, %155 : vector<2x64xf32>
    %158 = arith.divf %156, %157 : vector<2x64xf32>
    %159 = vector.extract_strided_slice %152 {offsets = [0, 64], sizes = [2, 64], strides = [1, 1]} : vector<2x256xf32> to vector<2x64xf32>
    %160 = arith.negf %159 : vector<2x64xf32>
    %161 = math.exp %160 : vector<2x64xf32>
    %cst_33 = arith.constant 1.000000e+00 : f32
    %162 = vector.broadcast %cst_33 : f32 to vector<2x64xf32>
    %163 = arith.addf %162, %161 : vector<2x64xf32>
    %164 = arith.divf %162, %163 : vector<2x64xf32>
    %165 = vector.extract_strided_slice %152 {offsets = [0, 128], sizes = [2, 64], strides = [1, 1]} : vector<2x256xf32> to vector<2x64xf32>
    %166 = math.tanh %165 : vector<2x64xf32>
    %167 = vector.extract_strided_slice %152 {offsets = [0, 192], sizes = [2, 64], strides = [1, 1]} : vector<2x256xf32> to vector<2x64xf32>
    %168 = arith.negf %167 : vector<2x64xf32>
    %169 = math.exp %168 : vector<2x64xf32>
    %cst_34 = arith.constant 1.000000e+00 : f32
    %170 = vector.broadcast %cst_34 : f32 to vector<2x64xf32>
    %171 = arith.addf %170, %169 : vector<2x64xf32>
    %172 = arith.divf %170, %171 : vector<2x64xf32>
    %173 = arith.mulf %164, %147 : vector<2x64xf32>
    %174 = arith.mulf %158, %166 : vector<2x64xf32>
    %175 = arith.addf %173, %174 : vector<2x64xf32>
    %176 = math.tanh %175 : vector<2x64xf32>
    %177 = arith.mulf %172, %176 : vector<2x64xf32>
    %178 = vector.extract_strided_slice %7 {offsets = [12, 0], sizes = [2, 256], strides = [1, 1]} : vector<16x256xf32> to vector<2x256xf32>
    %cst_35 = arith.constant dense<0.000000e+00> : vector<2x256xf32>
    %179 = tpu.matmul %177, %2, %cst_35 {dimension_numbers = #tpu.dot_dimension_numbers<[1], [0], [0], [1], [0, 0, 1, 1], [], []>} : vector<2x64xf32>, vector<64x256xf32>, vector<2x256xf32> -> vector<2x256xf32>
    %180 = arith.addf %178, %179 : vector<2x256xf32>
    %181 = vector.extract_strided_slice %180 {offsets = [0, 0], sizes = [2, 64], strides = [1, 1]} : vector<2x256xf32> to vector<2x64xf32>
    %182 = arith.negf %181 : vector<2x64xf32>
    %183 = math.exp %182 : vector<2x64xf32>
    %cst_36 = arith.constant 1.000000e+00 : f32
    %184 = vector.broadcast %cst_36 : f32 to vector<2x64xf32>
    %185 = arith.addf %184, %183 : vector<2x64xf32>
    %186 = arith.divf %184, %185 : vector<2x64xf32>
    %187 = vector.extract_strided_slice %180 {offsets = [0, 64], sizes = [2, 64], strides = [1, 1]} : vector<2x256xf32> to vector<2x64xf32>
    %188 = arith.negf %187 : vector<2x64xf32>
    %189 = math.exp %188 : vector<2x64xf32>
    %cst_37 = arith.constant 1.000000e+00 : f32
    %190 = vector.broadcast %cst_37 : f32 to vector<2x64xf32>
    %191 = arith.addf %190, %189 : vector<2x64xf32>
    %192 = arith.divf %190, %191 : vector<2x64xf32>
    %193 = vector.extract_strided_slice %180 {offsets = [0, 128], sizes = [2, 64], strides = [1, 1]} : vector<2x256xf32> to vector<2x64xf32>
    %194 = math.tanh %193 : vector<2x64xf32>
    %195 = vector.extract_strided_slice %180 {offsets = [0, 192], sizes = [2, 64], strides = [1, 1]} : vector<2x256xf32> to vector<2x64xf32>
    %196 = arith.negf %195 : vector<2x64xf32>
    %197 = math.exp %196 : vector<2x64xf32>
    %cst_38 = arith.constant 1.000000e+00 : f32
    %198 = vector.broadcast %cst_38 : f32 to vector<2x64xf32>
    %199 = arith.addf %198, %197 : vector<2x64xf32>
    %200 = arith.divf %198, %199 : vector<2x64xf32>
    %201 = arith.mulf %192, %175 : vector<2x64xf32>
    %202 = arith.mulf %186, %194 : vector<2x64xf32>
    %203 = arith.addf %201, %202 : vector<2x64xf32>
    %204 = math.tanh %203 : vector<2x64xf32>
    %205 = arith.mulf %200, %204 : vector<2x64xf32>
    %206 = vector.extract_strided_slice %7 {offsets = [14, 0], sizes = [2, 256], strides = [1, 1]} : vector<16x256xf32> to vector<2x256xf32>
    %cst_39 = arith.constant dense<0.000000e+00> : vector<2x256xf32>
    %207 = tpu.matmul %205, %2, %cst_39 {dimension_numbers = #tpu.dot_dimension_numbers<[1], [0], [0], [1], [0, 0, 1, 1], [], []>} : vector<2x64xf32>, vector<64x256xf32>, vector<2x256xf32> -> vector<2x256xf32>
    %208 = arith.addf %206, %207 : vector<2x256xf32>
    %209 = vector.extract_strided_slice %208 {offsets = [0, 0], sizes = [2, 64], strides = [1, 1]} : vector<2x256xf32> to vector<2x64xf32>
    %210 = arith.negf %209 : vector<2x64xf32>
    %211 = math.exp %210 : vector<2x64xf32>
    %cst_40 = arith.constant 1.000000e+00 : f32
    %212 = vector.broadcast %cst_40 : f32 to vector<2x64xf32>
    %213 = arith.addf %212, %211 : vector<2x64xf32>
    %214 = arith.divf %212, %213 : vector<2x64xf32>
    %215 = vector.extract_strided_slice %208 {offsets = [0, 64], sizes = [2, 64], strides = [1, 1]} : vector<2x256xf32> to vector<2x64xf32>
    %216 = arith.negf %215 : vector<2x64xf32>
    %217 = math.exp %216 : vector<2x64xf32>
    %cst_41 = arith.constant 1.000000e+00 : f32
    %218 = vector.broadcast %cst_41 : f32 to vector<2x64xf32>
    %219 = arith.addf %218, %217 : vector<2x64xf32>
    %220 = arith.divf %218, %219 : vector<2x64xf32>
    %221 = vector.extract_strided_slice %208 {offsets = [0, 128], sizes = [2, 64], strides = [1, 1]} : vector<2x256xf32> to vector<2x64xf32>
    %222 = math.tanh %221 : vector<2x64xf32>
    %223 = vector.extract_strided_slice %208 {offsets = [0, 192], sizes = [2, 64], strides = [1, 1]} : vector<2x256xf32> to vector<2x64xf32>
    %224 = arith.negf %223 : vector<2x64xf32>
    %225 = math.exp %224 : vector<2x64xf32>
    %cst_42 = arith.constant 1.000000e+00 : f32
    %226 = vector.broadcast %cst_42 : f32 to vector<2x64xf32>
    %227 = arith.addf %226, %225 : vector<2x64xf32>
    %228 = arith.divf %226, %227 : vector<2x64xf32>
    %229 = arith.mulf %220, %203 : vector<2x64xf32>
    %230 = arith.mulf %214, %222 : vector<2x64xf32>
    %231 = arith.addf %229, %230 : vector<2x64xf32>
    %232 = math.tanh %231 : vector<2x64xf32>
    %233 = arith.mulf %228, %232 : vector<2x64xf32>
    %c0_43 = arith.constant 0 : index
    %c0_44 = arith.constant 0 : index
    %234 = vector.load %arg5[%c0_43, %c0_44] : memref<6x64xf32, #tpu.memory_space<vmem>>, vector<6x64xf32>
    %cst_45 = arith.constant dense<0.000000e+00> : vector<2x64xf32>
    %235 = tpu.matmul %1, %234, %cst_45 {dimension_numbers = #tpu.dot_dimension_numbers<[1], [0], [0], [1], [0, 0, 1, 1], [], []>} : vector<2x6xf32>, vector<6x64xf32>, vector<2x64xf32> -> vector<2x64xf32>
    %c0_46 = arith.constant 0 : index
    %c0_47 = arith.constant 0 : index
    %236 = vector.load %arg6[%c0_46, %c0_47] : memref<1x64xf32, #tpu.memory_space<vmem>>, vector<1x64xf32>
    %237 = vector.broadcast %236 : vector<1x64xf32> to vector<2x64xf32>
    %238 = arith.addf %235, %237 : vector<2x64xf32>
    %cst_48 = arith.constant 0.000000e+00 : f32
    %239 = vector.broadcast %cst_48 : f32 to vector<2x64xf32>
    %240 = arith.maximumf %238, %239 : vector<2x64xf32>
    %c0_49 = arith.constant 0 : index
    %c0_50 = arith.constant 0 : index
    %241 = vector.load %arg7[%c0_49, %c0_50] : memref<64x32xf32, #tpu.memory_space<vmem>>, vector<64x32xf32>
    %cst_51 = arith.constant dense<0.000000e+00> : vector<2x32xf32>
    %242 = tpu.matmul %240, %241, %cst_51 {dimension_numbers = #tpu.dot_dimension_numbers<[1], [0], [0], [1], [0, 0, 1, 1], [], []>} : vector<2x64xf32>, vector<64x32xf32>, vector<2x32xf32> -> vector<2x32xf32>
    %c0_52 = arith.constant 0 : index
    %c0_53 = arith.constant 0 : index
    %243 = vector.load %arg8[%c0_52, %c0_53] : memref<1x32xf32, #tpu.memory_space<vmem>>, vector<1x32xf32>
    %244 = vector.broadcast %243 : vector<1x32xf32> to vector<2x32xf32>
    %245 = arith.addf %242, %244 : vector<2x32xf32>
    %cst_54 = arith.constant 0.000000e+00 : f32
    %246 = vector.broadcast %cst_54 : f32 to vector<2x32xf32>
    %247 = arith.maximumf %245, %246 : vector<2x32xf32>
    %248 = math.tanh %247 : vector<2x32xf32>
    %c0_55 = arith.constant 0 : index
    %c0_56 = arith.constant 0 : index
    %249 = vector.load %arg9[%c0_55, %c0_56] : memref<64x128xf32, #tpu.memory_space<vmem>>, vector<64x128xf32>
    %cst_57 = arith.constant dense<0.000000e+00> : vector<2x128xf32>
    %250 = tpu.matmul %233, %249, %cst_57 {dimension_numbers = #tpu.dot_dimension_numbers<[1], [0], [0], [1], [0, 0, 1, 1], [], []>} : vector<2x64xf32>, vector<64x128xf32>, vector<2x128xf32> -> vector<2x128xf32>
    %c0_58 = arith.constant 0 : index
    %c0_59 = arith.constant 0 : index
    %251 = vector.load %arg10[%c0_58, %c0_59] : memref<32x128xf32, #tpu.memory_space<vmem>>, vector<32x128xf32>
    %cst_60 = arith.constant dense<0.000000e+00> : vector<2x128xf32>
    %252 = tpu.matmul %248, %251, %cst_60 {dimension_numbers = #tpu.dot_dimension_numbers<[1], [0], [0], [1], [0, 0, 1, 1], [], []>} : vector<2x32xf32>, vector<32x128xf32>, vector<2x128xf32> -> vector<2x128xf32>
    %253 = arith.addf %250, %252 : vector<2x128xf32>
    %c0_61 = arith.constant 0 : index
    %c0_62 = arith.constant 0 : index
    %254 = vector.load %arg11[%c0_61, %c0_62] : memref<1x128xf32, #tpu.memory_space<vmem>>, vector<1x128xf32>
    %255 = vector.broadcast %254 : vector<1x128xf32> to vector<2x128xf32>
    %256 = arith.addf %253, %255 : vector<2x128xf32>
    %cst_63 = arith.constant 0.000000e+00 : f32
    %257 = vector.broadcast %cst_63 : f32 to vector<2x128xf32>
    %258 = arith.maximumf %256, %257 : vector<2x128xf32>
    %c0_64 = arith.constant 0 : index
    %c0_65 = arith.constant 0 : index
    %259 = vector.load %arg12[%c0_64, %c0_65] : memref<1x128xf32, #tpu.memory_space<vmem>>, vector<1x128xf32>
    %260 = vector.broadcast %259 : vector<1x128xf32> to vector<2x128xf32>
    %261 = arith.mulf %258, %260 : vector<2x128xf32>
    %262 = vector.extract_strided_slice %261 {offsets = [0, 0], sizes = [2, 64], strides = [1, 1]} : vector<2x128xf32> to vector<2x64xf32>
    %cst_66 = arith.constant dense<0.000000e+00> : vector<2xf32>
    %263 = vector.multi_reduction <add>, %262, %cst_66 [1] : vector<2x64xf32> to vector<2xf32>
    %264 = vector.shape_cast %263 : vector<2xf32> to vector<2x1xf32>
    %265 = vector.extract_strided_slice %261 {offsets = [0, 64], sizes = [2, 64], strides = [1, 1]} : vector<2x128xf32> to vector<2x64xf32>
    %cst_67 = arith.constant dense<0.000000e+00> : vector<2xf32>
    %266 = vector.multi_reduction <add>, %265, %cst_67 [1] : vector<2x64xf32> to vector<2xf32>
    %267 = vector.shape_cast %266 : vector<2xf32> to vector<2x1xf32>
    %268 = tpu.concatenate %264, %267 in 1 : vector<2x1xf32>, vector<2x1xf32> -> vector<2x2xf32>
    %c0_68 = arith.constant 0 : index
    %c0_69 = arith.constant 0 : index
    %269 = vector.load %arg13[%c0_68, %c0_69] : memref<1x2xf32, #tpu.memory_space<vmem>>, vector<1x2xf32>
    %270 = vector.broadcast %269 : vector<1x2xf32> to vector<2x2xf32>
    %271 = arith.addf %268, %270 : vector<2x2xf32>
    %272 = math.tanh %271 : vector<2x2xf32>
    %c0_70 = arith.constant 0 : index
    %c0_71 = arith.constant 0 : index
    %273 = vector.load %arg14[%c0_70, %c0_71] : memref<2x2xf32, #tpu.memory_space<vmem>>, vector<2x2xf32>
    tpu.vector_store %arg14[%c0_70, %c0_71], %272 {strides = array<i32>} : memref<2x2xf32, #tpu.memory_space<vmem>>, vector<2x2xf32>,
    return
  }
}

</mosaic_0001>

<llo_original>
// kernel: critic_forward.1
$region0: #{critic_forward.1}
  #allocation0 [shape = 'u32[]', space=smem, size = 0x4, offset = 0x4, fixed_abs, tag = 'smem constant byte address 0x4 - core index']
  #allocation1 [shape = 'u32[144,128]{1,0:T(1,128)}', space=vmem, size = 0x12000, scoped, tag = 'internal scratch']
  %s0 = inlined_call_operand.vmem [shape: f32[16,64], index: 0, kind: input, shape index: {}]
  %s1 = inlined_call_operand.vmem [shape: f32[2,6], index: 1, kind: input, shape index: {}]
  %s2 = inlined_call_operand.vmem [shape: f32[64,256], index: 2, kind: input, shape index: {}]
  %s3 = inlined_call_operand.vmem [shape: f32[64,256], index: 3, kind: input, shape index: {}]
  %s4 = inlined_call_operand.vmem [shape: f32[1,256], index: 4, kind: input, shape index: {}]
  %s5 = inlined_call_operand.vmem [shape: f32[6,64], index: 5, kind: input, shape index: {}]
  %s6 = inlined_call_operand.vmem [shape: f32[1,64], index: 6, kind: input, shape index: {}]
  %s7 = inlined_call_operand.vmem [shape: f32[64,32], index: 7, kind: input, shape index: {}]
  %s8 = inlined_call_operand.vmem [shape: f32[1,32], index: 8, kind: input, shape index: {}]
  %s9 = inlined_call_operand.vmem [shape: f32[64,128], index: 9, kind: input, shape index: {}]
  %s10 = inlined_call_operand.vmem [shape: f32[32,128], index: 10, kind: input, shape index: {}]
  %s11 = inlined_call_operand.vmem [shape: f32[1,128], index: 11, kind: input, shape index: {}]
  %s12 = inlined_call_operand.vmem [shape: f32[1,128], index: 12, kind: input, shape index: {}]
  %s13 = inlined_call_operand.vmem [shape: f32[1,2], index: 13, kind: input, shape index: {}]
  %s14 = inlined_call_operand.vmem [shape: f32[2,2], index: 14, kind: output, shape index: {}]
  %s15 = sld [smem:[#allocation0]]
  $region66: #{critic_forward.1} parent=0
    _
  %s17 = ssub.s32 1, %s15
  %s18 = scalar_select 0, %s17, %s15
  // Predicated region
  $region2: #{critic_forward.1} parent=0 // pred_check
    _
  $region3: #{critic_forward.1} parent=0 // pred_check_branch
    %20 = sbr.rel (0) target = $region5
  $region4: #{critic_forward.1} parent=0 // pred_region
    _
  $region5: #{critic_forward.1} parent=0 // pred_fallthru
    _
  // Predicated region
  $region6: #{critic_forward.1} parent=0 // pred_check
    _
  $region7: #{critic_forward.1} parent=0 // pred_check_branch
    %22 = sbr.rel (0) target = $region9
  $region8: #{critic_forward.1} parent=0 // pred_region
    _
  $region9: #{critic_forward.1} parent=0 // pred_fallthru
    _
  // Predicated region
  $region10: #{critic_forward.1} parent=0 // pred_check
    _
  $region11: #{critic_forward.1} parent=0 // pred_check_branch
    %24 = sbr.rel (0) target = $region13
  $region12: #{critic_forward.1} parent=0 // pred_region
    _
  $region13: #{critic_forward.1} parent=0 // pred_fallthru
    _
  // Predicated region
  $region14: #{critic_forward.1} parent=0 // pred_check
    _
  $region15: #{critic_forward.1} parent=0 // pred_check_branch
    %26 = sbr.rel (0) target = $region17
  $region16: #{critic_forward.1} parent=0 // pred_region
    _
  $region17: #{critic_forward.1} parent=0 // pred_fallthru
    _
  // Predicated region
  $region18: #{critic_forward.1} parent=0 // pred_check
    _
  $region19: #{critic_forward.1} parent=0 // pred_check_branch
    %28 = sbr.rel (0) target = $region21
  $region20: #{critic_forward.1} parent=0 // pred_region
    _
  $region21: #{critic_forward.1} parent=0 // pred_fallthru
    _
  // Predicated region
  $region22: #{critic_forward.1} parent=0 // pred_check
    _
  $region23: #{critic_forward.1} parent=0 // pred_check_branch
    %30 = sbr.rel (0) target = $region25
  $region24: #{critic_forward.1} parent=0 // pred_region
    _
  $region25: #{critic_forward.1} parent=0 // pred_fallthru
    _
  // Predicated region
  $region26: #{critic_forward.1} parent=0 // pred_check
    _
  $region27: #{critic_forward.1} parent=0 // pred_check_branch
    %32 = sbr.rel (0) target = $region29
  $region28: #{critic_forward.1} parent=0 // pred_region
    _
  $region29: #{critic_forward.1} parent=0 // pred_fallthru
    _
  // Predicated region
  $region30: #{critic_forward.1} parent=0 // pred_check
    _
  $region31: #{critic_forward.1} parent=0 // pred_check_branch
    %34 = sbr.rel (0) target = $region33
  $region32: #{critic_forward.1} parent=0 // pred_region
    _
  $region33: #{critic_forward.1} parent=0 // pred_fallthru
    _
  // Predicated region
  $region34: #{critic_forward.1} parent=0 // pred_check
    _
  $region35: #{critic_forward.1} parent=0 // pred_check_branch
    %36 = sbr.rel (0) target = $region37
  $region36: #{critic_forward.1} parent=0 // pred_region
    _
  $region37: #{critic_forward.1} parent=0 // pred_fallthru
    _
  // Predicated region
  $region38: #{critic_forward.1} parent=0 // pred_check
    _
  $region39: #{critic_forward.1} parent=0 // pred_check_branch
    %38 = sbr.rel (0) target = $region41
  $region40: #{critic_forward.1} parent=0 // pred_region
    _
  $region41: #{critic_forward.1} parent=0 // pred_fallthru
    _
  // Predicated region
  $region42: #{critic_forward.1} parent=0 // pred_check
    _
  $region43: #{critic_forward.1} parent=0 // pred_check_branch
    %40 = sbr.rel (0) target = $region45
  $region44: #{critic_forward.1} parent=0 // pred_region
    _
  $region45: #{critic_forward.1} parent=0 // pred_fallthru
    _
  // Predicated region
  $region46: #{critic_forward.1} parent=0 // pred_check
    _
  $region47: #{critic_forward.1} parent=0 // pred_check_branch
    %42 = sbr.rel (0) target = $region49
  $region48: #{critic_forward.1} parent=0 // pred_region
    _
  $region49: #{critic_forward.1} parent=0 // pred_fallthru
    _
  // Predicated region
  $region50: #{critic_forward.1} parent=0 // pred_check
    _
  $region51: #{critic_forward.1} parent=0 // pred_check_branch
    %44 = sbr.rel (0) target = $region53
  $region52: #{critic_forward.1} parent=0 // pred_region
    _
  $region53: #{critic_forward.1} parent=0 // pred_fallthru
    _
  // Predicated region
  $region54: #{critic_forward.1} parent=0 // pred_check
    _
  $region55: #{critic_forward.1} parent=0 // pred_check_branch
    %46 = sbr.rel (0) target = $region57
  $region56: #{critic_forward.1} parent=0 // pred_region
    _
  $region57: #{critic_forward.1} parent=0 // pred_fallthru
    _
  %v47 = vld [vmem:[%s0] sm:$0xff]
  %v48 = vld [vmem:[%s0 + $0x8] sm:$0xff]
  %v49 = vld [vmem:[%s1] sm:$0x3]
  %v50 = vld [vmem:[%s3] sm:$0xff]
  %v51 = vld [vmem:[%s3 + $0x8] sm:$0xff]
  %v52 = vld [vmem:[%s3 + $0x10] sm:$0xff]
  %v53 = vld [vmem:[%s3 + $0x18] sm:$0xff]
  %v54 = vld [vmem:[%s3 + $0x20] sm:$0xff]
  %v55 = vld [vmem:[%s3 + $0x28] sm:$0xff]
  %v56 = vld [vmem:[%s3 + $0x30] sm:$0xff]
  %v57 = vld [vmem:[%s3 + $0x38] sm:$0xff]
  %v58 = vld [vmem:[%s3 + $0x40] sm:$0xff]
  %v59 = vld [vmem:[%s3 + $0x48] sm:$0xff]
  %v60 = vld [vmem:[%s3 + $0x50] sm:$0xff]
  %v61 = vld [vmem:[%s3 + $0x58] sm:$0xff]
  %v62 = vld [vmem:[%s3 + $0x60] sm:$0xff]
  %v63 = vld [vmem:[%s3 + $0x68] sm:$0xff]
  %v64 = vld [vmem:[%s3 + $0x70] sm:$0xff]
  %v65 = vld [vmem:[%s3 + $0x78] sm:$0xff]
  %v66 = vld [vmem:[%s2] sm:$0xff]
  %v67 = vld [vmem:[%s2 + $0x8] sm:$0xff]
  %v68 = vld [vmem:[%s2 + $0x10] sm:$0xff]
  %v69 = vld [vmem:[%s2 + $0x18] sm:$0xff]
  %v70 = vld [vmem:[%s2 + $0x20] sm:$0xff]
  %v71 = vld [vmem:[%s2 + $0x28] sm:$0xff]
  %v72 = vld [vmem:[%s2 + $0x30] sm:$0xff]
  %v73 = vld [vmem:[%s2 + $0x38] sm:$0xff]
  %v74 = vld [vmem:[%s2 + $0x40] sm:$0xff]
  %v75 = vld [vmem:[%s2 + $0x48] sm:$0xff]
  %v76 = vld [vmem:[%s2 + $0x50] sm:$0xff]
  %v77 = vld [vmem:[%s2 + $0x58] sm:$0xff]
  %v78 = vld [vmem:[%s2 + $0x60] sm:$0xff]
  %v79 = vld [vmem:[%s2 + $0x68] sm:$0xff]
  %v80 = vld [vmem:[%s2 + $0x70] sm:$0xff]
  %v81 = vld [vmem:[%s2 + $0x78] sm:$0xff]
  %v82 = vld [vmem:[%s4] sm:$0x3]
  %v84 = vlaneseq
  %v85 = vshrl.u32 %v84, 7
  %v86 = vsub.s32 0, %v85
  %v87 = vrot.slane %v82, %v86
  %v88 = vlaneseq
  %v89 = vshrl.u32 %v88, 7
  %v90 = vsub.s32 1, %v89
  %v91 = vrot.slane %v82, %v90
  %vm94 = vcmask 523264
  %v96 = vsel %vm94, %v47, 0
  %v99 = vsel %vm94, %v48, 0
  %101 = vmatprep.subr.mxu0 0.0
  %102 = vmatpush1.msra.mxu0 0.0
  %103 = vmatprep.subr.mxu0 0.0
  %104 = vmatpush1.msra.mxu0 0.0
  %105 = vmatprep.subr.mxu0 0.0
  %106 = vmatpush1.msra.mxu0 0.0
  %107 = vmatprep.subr.mxu0 0.0
  %108 = vmatpush1.msra.mxu0 0.0
  %109 = vmatprep.subr.mxu0 0.0
  %110 = vmatpush1.msra.mxu0 0.0
  %111 = vmatprep.subr.mxu0 0.0
  %112 = vmatpush1.msra.mxu0 0.0
  %113 = vmatprep.subr.mxu0 0.0
  %114 = vmatpush1.msra.mxu0 0.0
  %115 = vmatprep.subr.mxu0 0.0
  %116 = vmatpush1.msra.mxu0 0.0
  %117 = vmatprep.subr.mxu0 %v81
  %118 = vmatpush1.msra.mxu0 %v80
  %119 = vmatprep.subr.mxu0 %v79
  %120 = vmatpush1.msra.mxu0 %v78
  %121 = vmatprep.subr.mxu0 %v77
  %122 = vmatpush1.msra.mxu0 %v76
  %123 = vmatprep.subr.mxu0 %v75
  %124 = vmatpush1.msra.mxu0 %v74
  %125 = vmatprep.subr.mxu0 %v73
  %126 = vmatpush1.msra.mxu0 %v72
  %127 = vmatprep.subr.mxu0 %v71
  %128 = vmatpush1.msra.mxu0 %v70
  %129 = vmatprep.subr.mxu0 %v69
  %130 = vmatpush1.msra.mxu0 %v68
  %131 = vmatprep.subr.mxu0 %v67
  %132 = vmatpush1.msra.mxu0 %v66
  %133 = vmatprep.subr.mxu0 0.0
  %134 = vmatpush2.msra.mxu0 0.0
  %135 = vmatprep.subr.mxu0 0.0
  %136 = vmatpush2.msra.mxu0 0.0
  %137 = vmatprep.subr.mxu0 0.0
  %138 = vmatpush2.msra.mxu0 0.0
  %139 = vmatprep.subr.mxu0 0.0
  %140 = vmatpush2.msra.mxu0 0.0
  %141 = vmatprep.subr.mxu0 0.0
  %142 = vmatpush2.msra.mxu0 0.0
  %143 = vmatprep.subr.mxu0 0.0
  %144 = vmatpush2.msra.mxu0 0.0
  %145 = vmatprep.subr.mxu0 0.0
  %146 = vmatpush2.msra.mxu0 0.0
  %147 = vmatprep.subr.mxu0 0.0
  %148 = vmatpush2.msra.mxu0 0.0
  %149 = vmatprep.subr.mxu0 0.0
  %150 = vmatpush2.msra.mxu0 0.0
  %151 = vmatprep.subr.mxu0 0.0
  %152 = vmatpush2.msra.mxu0 0.0
  %153 = vmatprep.subr.mxu0 0.0
  %154 = vmatpush2.msra.mxu0 0.0
  %155 = vmatprep.subr.mxu0 0.0
  %156 = vmatpush2.msra.mxu0 0.0
  %157 = vmatprep.subr.mxu0 0.0
  %158 = vmatpush2.msra.mxu0 0.0
  %159 = vmatprep.subr.mxu0 0.0
  %160 = vmatpush2.msra.mxu0 0.0
  %161 = vmatprep.subr.mxu0 0.0
  %162 = vmatpush2.msra.mxu0 0.0
  %163 = vmatprep.subr.mxu0 0.0
  %164 = vmatpush2.msra.mxu0 0.0
  %165 = vmatprep.mubr.f32.mxu0 0.0
  %166 = vmatmul.mubr.f32.gmra.mxu0 %v96
  %v167 = vpop.f32.mrf.mxu0
  %v168 = vadd.f32 %v87, %v167
  %v169 = vpop.f32.mrf.mxu0
  %v170 = vadd.f32 %v91, %v169
  %171 = vmatprep.mubr.f32.mxu0 0.0
  %172 = vmatmul.mubr.f32.gmra.mxu0 %v99
  %v173 = vpop.f32.mrf.mxu0
  %v174 = vadd.f32 %v87, %v173
  %v175 = vpop.f32.mrf.mxu0
  %v176 = vadd.f32 %v91, %v175
  %177 = vdwg.mxu0
  %v179 = vsel %vm94, 0.0, 0
  %181 = vmatprep.subr.mxu0 0.0
  %182 = vmatpush1.msra.mxu0 0.0
  %183 = vmatprep.subr.mxu0 0.0
  %184 = vmatpush1.msra.mxu0 0.0
  %185 = vmatprep.subr.mxu0 0.0
  %186 = vmatpush1.msra.mxu0 0.0
  %187 = vmatprep.subr.mxu0 0.0
  %188 = vmatpush1.msra.mxu0 0.0
  %189 = vmatprep.subr.mxu0 0.0
  %190 = vmatpush1.msra.mxu0 0.0
  %191 = vmatprep.subr.mxu0 0.0
  %192 = vmatpush1.msra.mxu0 0.0
  %193 = vmatprep.subr.mxu0 0.0
  %194 = vmatpush1.msra.mxu0 0.0
  %195 = vmatprep.subr.mxu0 0.0
  %196 = vmatpush1.msra.mxu0 0.0
  %197 = vmatprep.subr.mxu0 %v65
  %198 = vmatpush1.msra.mxu0 %v64
  %199 = vmatprep.subr.mxu0 %v63
  %200 = vmatpush1.msra.mxu0 %v62
  %201 = vmatprep.subr.mxu0 %v61
  %202 = vmatpush1.msra.mxu0 %v60
  %203 = vmatprep.subr.mxu0 %v59
  %204 = vmatpush1.msra.mxu0 %v58
  %205 = vmatprep.subr.mxu0 %v57
  %206 = vmatpush1.msra.mxu0 %v56
  %207 = vmatprep.subr.mxu0 %v55
  %208 = vmatpush1.msra.mxu0 %v54
  %209 = vmatprep.subr.mxu0 %v53
  %210 = vmatpush1.msra.mxu0 %v52
  %211 = vmatprep.subr.mxu0 %v51
  %212 = vmatpush1.msra.mxu0 %v50
  %213 = vmatprep.subr.mxu0 0.0
  %214 = vmatpush2.msra.mxu0 0.0
  %215 = vmatprep.subr.mxu0 0.0
  %216 = vmatpush2.msra.mxu0 0.0
  %217 = vmatprep.subr.mxu0 0.0
  %218 = vmatpush2.msra.mxu0 0.0
  %219 = vmatprep.subr.mxu0 0.0
  %220 = vmatpush2.msra.mxu0 0.0
  %221 = vmatprep.subr.mxu0 0.0
  %222 = vmatpush2.msra.mxu0 0.0
  %223 = vmatprep.subr.mxu0 0.0
  %224 = vmatpush2.msra.mxu0 0.0
  %225 = vmatprep.subr.mxu0 0.0
  %226 = vmatpush2.msra.mxu0 0.0
  %227 = vmatprep.subr.mxu0 0.0
  %228 = vmatpush2.msra.mxu0 0.0
  %229 = vmatprep.subr.mxu0 0.0
  %230 = vmatpush2.msra.mxu0 0.0
  %231 = vmatprep.subr.mxu0 0.0
  %232 = vmatpush2.msra.mxu0 0.0
  %233 = vmatprep.subr.mxu0 0.0
  %234 = vmatpush2.msra.mxu0 0.0
  %235 = vmatprep.subr.mxu0 0.0
  %236 = vmatpush2.msra.mxu0 0.0
  %237 = vmatprep.subr.mxu0 0.0
  %238 = vmatpush2.msra.mxu0 0.0
  %239 = vmatprep.subr.mxu0 0.0
  %240 = vmatpush2.msra.mxu0 0.0
  %241 = vmatprep.subr.mxu0 0.0
  %242 = vmatpush2.msra.mxu0 0.0
  %243 = vmatprep.subr.mxu0 0.0
  %244 = vmatpush2.msra.mxu0 0.0
  %245 = vmatprep.mubr.f32.mxu0 0.0
  %246 = vmatmul.mubr.f32.gmra.mxu0 %v179
  %v247 = vpop.f32.mrf.mxu0
  %v248 = vadd.f32 0.0, %v247
  %v249 = vpop.f32.mrf.mxu0
  %v250 = vadd.f32 0.0, %v249
  %251 = vdwg.mxu0
  %v252 = vadd.f32 %v168, %v248
  %v253 = vadd.f32 %v170, %v250
  %v254 = vxor.u32 %v252, 2147483648
  %v255 = vmul.f32 %v254, 1.442695
  %v256 = vpow.pop %v255
  %v257 = vadd.f32 %v256, 1.0
  %v258 = vrcp.pop %v257
  %v259 = vmul.f32 1.0, %v258
  %v260 = vtanh.pop %v253
  %v261 = vxor.u32 %v253, 2147483648
  %v262 = vmul.f32 %v261, 1.442695
  %v263 = vpow.pop %v262
  %v264 = vadd.f32 %v263, 1.0
  %v265 = vrcp.pop %v264
  %v266 = vmul.f32 1.0, %v265
  %v267 = vmul.f32 %v259, 0.0
  %v268 = vmul.f32 %v259, %v260
  %270 = vrot.lane.b32.xlu0 %v268, 64
  %v271 = vpop.permute.xlu0 %270
  %v273 = vadd.f32 %v267, %v271
  %v274 = vtanh.pop %v273
  %v275 = vmul.f32 %v266, %v274
  %277 = vrot.lane.b32.xlu0 %v275, 64
  %v278 = vpop.permute.xlu0 %277
  %v279 = vsel %vm94, %v278, 0
  %281 = vmatprep.subr.mxu0 0.0
  %282 = vmatpush1.msra.mxu0 0.0
  %283 = vmatprep.subr.mxu0 0.0
  %284 = vmatpush1.msra.mxu0 0.0
  %285 = vmatprep.subr.mxu0 0.0
  %286 = vmatpush1.msra.mxu0 0.0
  %287 = vmatprep.subr.mxu0 0.0
  %288 = vmatpush1.msra.mxu0 0.0
  %289 = vmatprep.subr.mxu0 0.0
  %290 = vmatpush1.msra.mxu0 0.0
  %291 = vmatprep.subr.mxu0 0.0
  %292 = vmatpush1.msra.mxu0 0.0
  %293 = vmatprep.subr.mxu0 0.0
  %294 = vmatpush1.msra.mxu0 0.0
  %295 = vmatprep.subr.mxu0 0.0
  %296 = vmatpush1.msra.mxu0 0.0
  %297 = vmatprep.subr.mxu0 %v65
  %298 = vmatpush1.msra.mxu0 %v64
  %299 = vmatprep.subr.mxu0 %v63
  %300 = vmatpush1.msra.mxu0 %v62
  %301 = vmatprep.subr.mxu0 %v61
  %302 = vmatpush1.msra.mxu0 %v60
  %303 = vmatprep.subr.mxu0 %v59
  %304 = vmatpush1.msra.mxu0 %v58
  %305 = vmatprep.subr.mxu0 %v57
  %306 = vmatpush1.msra.mxu0 %v56
  %307 = vmatprep.subr.mxu0 %v55
  %308 = vmatpush1.msra.mxu0 %v54
  %309 = vmatprep.subr.mxu0 %v53
  %310 = vmatpush1.msra.mxu0 %v52
  %311 = vmatprep.subr.mxu0 %v51
  %312 = vmatpush1.msra.mxu0 %v50
  %313 = vmatprep.subr.mxu0 0.0
  %314 = vmatpush2.msra.mxu0 0.0
  %315 = vmatprep.subr.mxu0 0.0
  %316 = vmatpush2.msra.mxu0 0.0
  %317 = vmatprep.subr.mxu0 0.0
  %318 = vmatpush2.msra.mxu0 0.0
  %319 = vmatprep.subr.mxu0 0.0
  %320 = vmatpush2.msra.mxu0 0.0
  %321 = vmatprep.subr.mxu0 0.0
  %322 = vmatpush2.msra.mxu0 0.0
  %323 = vmatprep.subr.mxu0 0.0
  %324 = vmatpush2.msra.mxu0 0.0
  %325 = vmatprep.subr.mxu0 0.0
  %326 = vmatpush2.msra.mxu0 0.0
  %327 = vmatprep.subr.mxu0 0.0
  %328 = vmatpush2.msra.mxu0 0.0
  %329 = vmatprep.subr.mxu0 0.0
  %330 = vmatpush2.msra.mxu0 0.0
  %331 = vmatprep.subr.mxu0 0.0
  %332 = vmatpush2.msra.mxu0 0.0
  %333 = vmatprep.subr.mxu0 0.0
  %334 = vmatpush2.msra.mxu0 0.0
  %335 = vmatprep.subr.mxu0 0.0
  %336 = vmatpush2.msra.mxu0 0.0
  %337 = vmatprep.subr.mxu0 0.0
  %338 = vmatpush2.msra.mxu0 0.0
  %339 = vmatprep.subr.mxu0 0.0
  %340 = vmatpush2.msra.mxu0 0.0
  %341 = vmatprep.subr.mxu0 0.0
  %342 = vmatpush2.msra.mxu0 0.0
  %343 = vmatprep.subr.mxu0 0.0
  %344 = vmatpush2.msra.mxu0 0.0
  %345 = vmatprep.mubr.f32.mxu0 0.0
  %346 = vmatmul.mubr.f32.gmra.mxu0 %v279
  %v347 = vpop.f32.mrf.mxu0
  %v348 = vadd.f32 0.0, %v347
  %v349 = vpop.f32.mrf.mxu0
  %v350 = vadd.f32 0.0, %v349
  %351 = vdwg.mxu0
  %v354 = vrot.slane %v348, 6
  %v355 = vrot.slane %v350, 6
  %v358 = vadd.f32 %v168, %v354
  %v359 = vadd.f32 %v170, %v355
  %v360 = vxor.u32 %v358, 2147483648
  %v361 = vmul.f32 %v360, 1.442695
  %v362 = vpow.pop %v361
  %v363 = vadd.f32 %v362, 1.0
  %v364 = vrcp.pop %v363
  %v365 = vmul.f32 1.0, %v364
  %v366 = vtanh.pop %v359
  %v367 = vxor.u32 %v359, 2147483648
  %v368 = vmul.f32 %v367, 1.442695
  %v369 = vpow.pop %v368
  %v370 = vadd.f32 %v369, 1.0
  %v371 = vrcp.pop %v370
  %v372 = vmul.f32 1.0, %v371
  %v374 = vrot.slane %v273, 6
  %v376 = vmul.f32 %v365, %v374
  %v377 = vmul.f32 %v365, %v366
  %379 = vrot.lane.b32.xlu0 %v377, 64
  %v380 = vpop.permute.xlu0 %379
  %v382 = vadd.f32 %v376, %v380
  %v383 = vtanh.pop %v382
  %v384 = vmul.f32 %v372, %v383
  %v386 = vrot.slane %v384, 2
  %387 = vrot.lane.b32.xlu0 %v386, 64
  %v388 = vpop.permute.xlu0 %387
  %v389 = vsel %vm94, %v388, 0
  %391 = vmatprep.subr.mxu0 0.0
  %392 = vmatpush1.msra.mxu0 0.0
  %393 = vmatprep.subr.mxu0 0.0
  %394 = vmatpush1.msra.mxu0 0.0
  %395 = vmatprep.subr.mxu0 0.0
  %396 = vmatpush1.msra.mxu0 0.0
  %397 = vmatprep.subr.mxu0 0.0
  %398 = vmatpush1.msra.mxu0 0.0
  %399 = vmatprep.subr.mxu0 0.0
  %400 = vmatpush1.msra.mxu0 0.0
  %401 = vmatprep.subr.mxu0 0.0
  %402 = vmatpush1.msra.mxu0 0.0
  %403 = vmatprep.subr.mxu0 0.0
  %404 = vmatpush1.msra.mxu0 0.0
  %405 = vmatprep.subr.mxu0 0.0
  %406 = vmatpush1.msra.mxu0 0.0
  %407 = vmatprep.subr.mxu0 %v65
  %408 = vmatpush1.msra.mxu0 %v64
  %409 = vmatprep.subr.mxu0 %v63
  %410 = vmatpush1.msra.mxu0 %v62
  %411 = vmatprep.subr.mxu0 %v61
  %412 = vmatpush1.msra.mxu0 %v60
  %413 = vmatprep.subr.mxu0 %v59
  %414 = vmatpush1.msra.mxu0 %v58
  %415 = vmatprep.subr.mxu0 %v57
  %416 = vmatpush1.msra.mxu0 %v56
  %417 = vmatprep.subr.mxu0 %v55
  %418 = vmatpush1.msra.mxu0 %v54
  %419 = vmatprep.subr.mxu0 %v53
  %420 = vmatpush1.msra.mxu0 %v52
  %421 = vmatprep.subr.mxu0 %v51
  %422 = vmatpush1.msra.mxu0 %v50
  %423 = vmatprep.subr.mxu0 0.0
  %424 = vmatpush2.msra.mxu0 0.0
  %425 = vmatprep.subr.mxu0 0.0
  %426 = vmatpush2.msra.mxu0 0.0
  %427 = vmatprep.subr.mxu0 0.0
  %428 = vmatpush2.msra.mxu0 0.0
  %429 = vmatprep.subr.mxu0 0.0
  %430 = vmatpush2.msra.mxu0 0.0
  %431 = vmatprep.subr.mxu0 0.0
  %432 = vmatpush2.msra.mxu0 0.0
  %433 = vmatprep.subr.mxu0 0.0
  %434 = vmatpush2.msra.mxu0 0.0
  %435 = vmatprep.subr.mxu0 0.0
  %436 = vmatpush2.msra.mxu0 0.0
  %437 = vmatprep.subr.mxu0 0.0
  %438 = vmatpush2.msra.mxu0 0.0
  %439 = vmatprep.subr.mxu0 0.0
  %440 = vmatpush2.msra.mxu0 0.0
  %441 = vmatprep.subr.mxu0 0.0
  %442 = vmatpush2.msra.mxu0 0.0
  %443 = vmatprep.subr.mxu0 0.0
  %444 = vmatpush2.msra.mxu0 0.0
  %445 = vmatprep.subr.mxu0 0.0
  %446 = vmatpush2.msra.mxu0 0.0
  %447 = vmatprep.subr.mxu0 0.0
  %448 = vmatpush2.msra.mxu0 0.0
  %449 = vmatprep.subr.mxu0 0.0
  %450 = vmatpush2.msra.mxu0 0.0
  %451 = vmatprep.subr.mxu0 0.0
  %452 = vmatpush2.msra.mxu0 0.0
  %453 = vmatprep.subr.mxu0 0.0
  %454 = vmatpush2.msra.mxu0 0.0
  %455 = vmatprep.mubr.f32.mxu0 0.0
  %456 = vmatmul.mubr.f32.gmra.mxu0 %v389
  %v457 = vpop.f32.mrf.mxu0
  %v458 = vadd.f32 0.0, %v457
  %v459 = vpop.f32.mrf.mxu0
  %v460 = vadd.f32 0.0, %v459
  %461 = vdwg.mxu0
  %v464 = vrot.slane %v458, 4
  %v465 = vrot.slane %v460, 4
  %v468 = vadd.f32 %v168, %v464
  %v469 = vadd.f32 %v170, %v465
  %v470 = vxor.u32 %v468, 2147483648
  %v471 = vmul.f32 %v470, 1.442695
  %v472 = vpow.pop %v471
  %v473 = vadd.f32 %v472, 1.0
  %v474 = vrcp.pop %v473
  %v475 = vmul.f32 1.0, %v474
  %v476 = vtanh.pop %v469
  %v477 = vxor.u32 %v469, 2147483648
  %v478 = vmul.f32 %v477, 1.442695
  %v479 = vpow.pop %v478
  %v480 = vadd.f32 %v479, 1.0
  %v481 = vrcp.pop %v480
  %v482 = vmul.f32 1.0, %v481
  %v484 = vrot.slane %v382, 6
  %v486 = vmul.f32 %v475, %v484
  %v487 = vmul.f32 %v475, %v476
  %489 = vrot.lane.b32.xlu0 %v487, 64
  %v490 = vpop.permute.xlu0 %489
  %v492 = vadd.f32 %v486, %v490
  %v493 = vtanh.pop %v492
  %v494 = vmul.f32 %v482, %v493
  %v496 = vrot.slane %v494, 4
  %497 = vrot.lane.b32.xlu0 %v496, 64
  %v498 = vpop.permute.xlu0 %497
  %v499 = vsel %vm94, %v498, 0
  %501 = vmatprep.subr.mxu0 0.0
  %502 = vmatpush1.msra.mxu0 0.0
  %503 = vmatprep.subr.mxu0 0.0
  %504 = vmatpush1.msra.mxu0 0.0
  %505 = vmatprep.subr.mxu0 0.0
  %506 = vmatpush1.msra.mxu0 0.0
  %507 = vmatprep.subr.mxu0 0.0
  %508 = vmatpush1.msra.mxu0 0.0
  %509 = vmatprep.subr.mxu0 0.0
  %510 = vmatpush1.msra.mxu0 0.0
  %511 = vmatprep.subr.mxu0 0.0
  %512 = vmatpush1.msra.mxu0 0.0
  %513 = vmatprep.subr.mxu0 0.0
  %514 = vmatpush1.msra.mxu0 0.0
  %515 = vmatprep.subr.mxu0 0.0
  %516 = vmatpush1.msra.mxu0 0.0
  %517 = vmatprep.subr.mxu0 %v65
  %518 = vmatpush1.msra.mxu0 %v64
  %519 = vmatprep.subr.mxu0 %v63
  %520 = vmatpush1.msra.mxu0 %v62
  %521 = vmatprep.subr.mxu0 %v61
  %522 = vmatpush1.msra.mxu0 %v60
  %523 = vmatprep.subr.mxu0 %v59
  %524 = vmatpush1.msra.mxu0 %v58
  %525 = vmatprep.subr.mxu0 %v57
  %526 = vmatpush1.msra.mxu0 %v56
  %527 = vmatprep.subr.mxu0 %v55
  %528 = vmatpush1.msra.mxu0 %v54
  %529 = vmatprep.subr.mxu0 %v53
  %530 = vmatpush1.msra.mxu0 %v52
  %531 = vmatprep.subr.mxu0 %v51
  %532 = vmatpush1.msra.mxu0 %v50
  %533 = vmatprep.subr.mxu0 0.0
  %534 = vmatpush2.msra.mxu0 0.0
  %535 = vmatprep.subr.mxu0 0.0
  %536 = vmatpush2.msra.mxu0 0.0
  %537 = vmatprep.subr.mxu0 0.0
  %538 = vmatpush2.msra.mxu0 0.0
  %539 = vmatprep.subr.mxu0 0.0
  %540 = vmatpush2.msra.mxu0 0.0
  %541 = vmatprep.subr.mxu0 0.0
  %542 = vmatpush2.msra.mxu0 0.0
  %543 = vmatprep.subr.mxu0 0.0
  %544 = vmatpush2.msra.mxu0 0.0
  %545 = vmatprep.subr.mxu0 0.0
  %546 = vmatpush2.msra.mxu0 0.0
  %547 = vmatprep.subr.mxu0 0.0
  %548 = vmatpush2.msra.mxu0 0.0
  %549 = vmatprep.subr.mxu0 0.0
  %550 = vmatpush2.msra.mxu0 0.0
  %551 = vmatprep.subr.mxu0 0.0
  %552 = vmatpush2.msra.mxu0 0.0
  %553 = vmatprep.subr.mxu0 0.0
  %554 = vmatpush2.msra.mxu0 0.0
  %555 = vmatprep.subr.mxu0 0.0
  %556 = vmatpush2.msra.mxu0 0.0
  %557 = vmatprep.subr.mxu0 0.0
  %558 = vmatpush2.msra.mxu0 0.0
  %559 = vmatprep.subr.mxu0 0.0
  %560 = vmatpush2.msra.mxu0 0.0
  %561 = vmatprep.subr.mxu0 0.0
  %562 = vmatpush2.msra.mxu0 0.0
  %563 = vmatprep.subr.mxu0 0.0
  %564 = vmatpush2.msra.mxu0 0.0
  %565 = vmatprep.mubr.f32.mxu0 0.0
  %566 = vmatmul.mubr.f32.gmra.mxu0 %v499
  %v567 = vpop.f32.mrf.mxu0
  %v568 = vadd.f32 0.0, %v567
  %v569 = vpop.f32.mrf.mxu0
  %v570 = vadd.f32 0.0, %v569
  %571 = vdwg.mxu0
  %v574 = vrot.slane %v568, 2
  %v575 = vrot.slane %v570, 2
  %v578 = vadd.f32 %v168, %v574
  %v579 = vadd.f32 %v170, %v575
  %v580 = vxor.u32 %v578, 2147483648
  %v581 = vmul.f32 %v580, 1.442695
  %v582 = vpow.pop %v581
  %v583 = vadd.f32 %v582, 1.0
  %v584 = vrcp.pop %v583
  %v585 = vmul.f32 1.0, %v584
  %v586 = vtanh.pop %v579
  %v587 = vxor.u32 %v579, 2147483648
  %v588 = vmul.f32 %v587, 1.442695
  %v589 = vpow.pop %v588
  %v590 = vadd.f32 %v589, 1.0
  %v591 = vrcp.pop %v590
  %v592 = vmul.f32 1.0, %v591
  %v594 = vrot.slane %v492, 6
  %v596 = vmul.f32 %v585, %v594
  %v597 = vmul.f32 %v585, %v586
  %599 = vrot.lane.b32.xlu0 %v597, 64
  %v600 = vpop.permute.xlu0 %599
  %v602 = vadd.f32 %v596, %v600
  %v603 = vtanh.pop %v602
  %v604 = vmul.f32 %v592, %v603
  %v606 = vrot.slane %v604, 6
  %607 = vrot.lane.b32.xlu0 %v606, 64
  %v608 = vpop.permute.xlu0 %607
  %v609 = vsel %vm94, %v608, 0
  %611 = vmatprep.subr.mxu0 0.0
  %612 = vmatpush1.msra.mxu0 0.0
  %613 = vmatprep.subr.mxu0 0.0
  %614 = vmatpush1.msra.mxu0 0.0
  %615 = vmatprep.subr.mxu0 0.0
  %616 = vmatpush1.msra.mxu0 0.0
  %617 = vmatprep.subr.mxu0 0.0
  %618 = vmatpush1.msra.mxu0 0.0
  %619 = vmatprep.subr.mxu0 0.0
  %620 = vmatpush1.msra.mxu0 0.0
  %621 = vmatprep.subr.mxu0 0.0
  %622 = vmatpush1.msra.mxu0 0.0
  %623 = vmatprep.subr.mxu0 0.0
  %624 = vmatpush1.msra.mxu0 0.0
  %625 = vmatprep.subr.mxu0 0.0
  %626 = vmatpush1.msra.mxu0 0.0
  %627 = vmatprep.subr.mxu0 %v65
  %628 = vmatpush1.msra.mxu0 %v64
  %629 = vmatprep.subr.mxu0 %v63
  %630 = vmatpush1.msra.mxu0 %v62
  %631 = vmatprep.subr.mxu0 %v61
  %632 = vmatpush1.msra.mxu0 %v60
  %633 = vmatprep.subr.mxu0 %v59
  %634 = vmatpush1.msra.mxu0 %v58
  %635 = vmatprep.subr.mxu0 %v57
  %636 = vmatpush1.msra.mxu0 %v56
  %637 = vmatprep.subr.mxu0 %v55
  %638 = vmatpush1.msra.mxu0 %v54
  %639 = vmatprep.subr.mxu0 %v53
  %640 = vmatpush1.msra.mxu0 %v52
  %641 = vmatprep.subr.mxu0 %v51
  %642 = vmatpush1.msra.mxu0 %v50
  %643 = vmatprep.subr.mxu0 0.0
  %644 = vmatpush2.msra.mxu0 0.0
  %645 = vmatprep.subr.mxu0 0.0
  %646 = vmatpush2.msra.mxu0 0.0
  %647 = vmatprep.subr.mxu0 0.0
  %648 = vmatpush2.msra.mxu0 0.0
  %649 = vmatprep.subr.mxu0 0.0
  %650 = vmatpush2.msra.mxu0 0.0
  %651 = vmatprep.subr.mxu0 0.0
  %652 = vmatpush2.msra.mxu0 0.0
  %653 = vmatprep.subr.mxu0 0.0
  %654 = vmatpush2.msra.mxu0 0.0
  %655 = vmatprep.subr.mxu0 0.0
  %656 = vmatpush2.msra.mxu0 0.0
  %657 = vmatprep.subr.mxu0 0.0
  %658 = vmatpush2.msra.mxu0 0.0
  %659 = vmatprep.subr.mxu0 0.0
  %660 = vmatpush2.msra.mxu0 0.0
  %661 = vmatprep.subr.mxu0 0.0
  %662 = vmatpush2.msra.mxu0 0.0
  %663 = vmatprep.subr.mxu0 0.0
  %664 = vmatpush2.msra.mxu0 0.0
  %665 = vmatprep.subr.mxu0 0.0
  %666 = vmatpush2.msra.mxu0 0.0
  %667 = vmatprep.subr.mxu0 0.0
  %668 = vmatpush2.msra.mxu0 0.0
  %669 = vmatprep.subr.mxu0 0.0
  %670 = vmatpush2.msra.mxu0 0.0
  %671 = vmatprep.subr.mxu0 0.0
  %672 = vmatpush2.msra.mxu0 0.0
  %673 = vmatprep.subr.mxu0 0.0
  %674 = vmatpush2.msra.mxu0 0.0
  %675 = vmatprep.mubr.f32.mxu0 0.0
  %676 = vmatmul.mubr.f32.gmra.mxu0 %v609
  %v677 = vpop.f32.mrf.mxu0
  %v678 = vadd.f32 0.0, %v677
  %v679 = vpop.f32.mrf.mxu0
  %v680 = vadd.f32 0.0, %v679
  %681 = vdwg.mxu0
  %v682 = vadd.f32 %v174, %v678
  %v683 = vadd.f32 %v176, %v680
  %v684 = vxor.u32 %v682, 2147483648
  %v685 = vmul.f32 %v684, 1.442695
  %v686 = vpow.pop %v685
  %v687 = vadd.f32 %v686, 1.0
  %v688 = vrcp.pop %v687
  %v689 = vmul.f32 1.0, %v688
  %v690 = vtanh.pop %v683
  %v691 = vxor.u32 %v683, 2147483648
  %v692 = vmul.f32 %v691, 1.442695
  %v693 = vpow.pop %v692
  %v694 = vadd.f32 %v693, 1.0
  %v695 = vrcp.pop %v694
  %v696 = vmul.f32 1.0, %v695
  %v698 = vrot.slane %v602, 6
  %v700 = vmul.f32 %v689, %v698
  %v701 = vmul.f32 %v689, %v690
  %703 = vrot.lane.b32.xlu0 %v701, 64
  %v704 = vpop.permute.xlu0 %703
  %v706 = vadd.f32 %v700, %v704
  %v707 = vtanh.pop %v706
  %v708 = vmul.f32 %v696, %v707
  %710 = vrot.lane.b32.xlu0 %v708, 64
  %v711 = vpop.permute.xlu0 %710
  %v712 = vsel %vm94, %v711, 0
  %714 = vmatprep.subr.mxu0 0.0
  %715 = vmatpush1.msra.mxu0 0.0
  %716 = vmatprep.subr.mxu0 0.0
  %717 = vmatpush1.msra.mxu0 0.0
  %718 = vmatprep.subr.mxu0 0.0
  %719 = vmatpush1.msra.mxu0 0.0
  %720 = vmatprep.subr.mxu0 0.0
  %721 = vmatpush1.msra.mxu0 0.0
  %722 = vmatprep.subr.mxu0 0.0
  %723 = vmatpush1.msra.mxu0 0.0
  %724 = vmatprep.subr.mxu0 0.0
  %725 = vmatpush1.msra.mxu0 0.0
  %726 = vmatprep.subr.mxu0 0.0
  %727 = vmatpush1.msra.mxu0 0.0
  %728 = vmatprep.subr.mxu0 0.0
  %729 = vmatpush1.msra.mxu0 0.0
  %730 = vmatprep.subr.mxu0 %v65
  %731 = vmatpush1.msra.mxu0 %v64
  %732 = vmatprep.subr.mxu0 %v63
  %733 = vmatpush1.msra.mxu0 %v62
  %734 = vmatprep.subr.mxu0 %v61
  %735 = vmatpush1.msra.mxu0 %v60
  %736 = vmatprep.subr.mxu0 %v59
  %737 = vmatpush1.msra.mxu0 %v58
  %738 = vmatprep.subr.mxu0 %v57
  %739 = vmatpush1.msra.mxu0 %v56
  %740 = vmatprep.subr.mxu0 %v55
  %741 = vmatpush1.msra.mxu0 %v54
  %742 = vmatprep.subr.mxu0 %v53
  %743 = vmatpush1.msra.mxu0 %v52
  %744 = vmatprep.subr.mxu0 %v51
  %745 = vmatpush1.msra.mxu0 %v50
  %746 = vmatprep.subr.mxu0 0.0
  %747 = vmatpush2.msra.mxu0 0.0
  %748 = vmatprep.subr.mxu0 0.0
  %749 = vmatpush2.msra.mxu0 0.0
  %750 = vmatprep.subr.mxu0 0.0
  %751 = vmatpush2.msra.mxu0 0.0
  %752 = vmatprep.subr.mxu0 0.0
  %753 = vmatpush2.msra.mxu0 0.0
  %754 = vmatprep.subr.mxu0 0.0
  %755 = vmatpush2.msra.mxu0 0.0
  %756 = vmatprep.subr.mxu0 0.0
  %757 = vmatpush2.msra.mxu0 0.0
  %758 = vmatprep.subr.mxu0 0.0
  %759 = vmatpush2.msra.mxu0 0.0
  %760 = vmatprep.subr.mxu0 0.0
  %761 = vmatpush2.msra.mxu0 0.0
  %762 = vmatprep.subr.mxu0 0.0
  %763 = vmatpush2.msra.mxu0 0.0
  %764 = vmatprep.subr.mxu0 0.0
  %765 = vmatpush2.msra.mxu0 0.0
  %766 = vmatprep.subr.mxu0 0.0
  %767 = vmatpush2.msra.mxu0 0.0
  %768 = vmatprep.subr.mxu0 0.0
  %769 = vmatpush2.msra.mxu0 0.0
  %770 = vmatprep.subr.mxu0 0.0
  %771 = vmatpush2.msra.mxu0 0.0
  %772 = vmatprep.subr.mxu0 0.0
  %773 = vmatpush2.msra.mxu0 0.0
  %774 = vmatprep.subr.mxu0 0.0
  %775 = vmatpush2.msra.mxu0 0.0
  %776 = vmatprep.subr.mxu0 0.0
  %777 = vmatpush2.msra.mxu0 0.0
  %778 = vmatprep.mubr.f32.mxu0 0.0
  %779 = vmatmul.mubr.f32.gmra.mxu0 %v712
  %v780 = vpop.f32.mrf.mxu0
  %v781 = vadd.f32 0.0, %v780
  %v782 = vpop.f32.mrf.mxu0
  %v783 = vadd.f32 0.0, %v782
  %784 = vdwg.mxu0
  %v787 = vrot.slane %v781, 6
  %v788 = vrot.slane %v783, 6
  %v791 = vadd.f32 %v174, %v787
  %v792 = vadd.f32 %v176, %v788
  %v793 = vxor.u32 %v791, 2147483648
  %v794 = vmul.f32 %v793, 1.442695
  %v795 = vpow.pop %v794
  %v796 = vadd.f32 %v795, 1.0
  %v797 = vrcp.pop %v796
  %v798 = vmul.f32 1.0, %v797
  %v799 = vtanh.pop %v792
  %v800 = vxor.u32 %v792, 2147483648
  %v801 = vmul.f32 %v800, 1.442695
  %v802 = vpow.pop %v801
  %v803 = vadd.f32 %v802, 1.0
  %v804 = vrcp.pop %v803
  %v805 = vmul.f32 1.0, %v804
  %v807 = vrot.slane %v706, 6
  %v809 = vmul.f32 %v798, %v807
  %v810 = vmul.f32 %v798, %v799
  %812 = vrot.lane.b32.xlu0 %v810, 64
  %v813 = vpop.permute.xlu0 %812
  %v815 = vadd.f32 %v809, %v813
  %v816 = vtanh.pop %v815
  %v817 = vmul.f32 %v805, %v816
  %v819 = vrot.slane %v817, 2
  %820 = vrot.lane.b32.xlu0 %v819, 64
  %v821 = vpop.permute.xlu0 %820
  %v822 = vsel %vm94, %v821, 0
  %824 = vmatprep.subr.mxu0 0.0
  %825 = vmatpush1.msra.mxu0 0.0
  %826 = vmatprep.subr.mxu0 0.0
  %827 = vmatpush1.msra.mxu0 0.0
  %828 = vmatprep.subr.mxu0 0.0
  %829 = vmatpush1.msra.mxu0 0.0
  %830 = vmatprep.subr.mxu0 0.0
  %831 = vmatpush1.msra.mxu0 0.0
  %832 = vmatprep.subr.mxu0 0.0
  %833 = vmatpush1.msra.mxu0 0.0
  %834 = vmatprep.subr.mxu0 0.0
  %835 = vmatpush1.msra.mxu0 0.0
  %836 = vmatprep.subr.mxu0 0.0
  %837 = vmatpush1.msra.mxu0 0.0
  %838 = vmatprep.subr.mxu0 0.0
  %839 = vmatpush1.msra.mxu0 0.0
  %840 = vmatprep.subr.mxu0 %v65
  %841 = vmatpush1.msra.mxu0 %v64
  %842 = vmatprep.subr.mxu0 %v63
  %843 = vmatpush1.msra.mxu0 %v62
  %844 = vmatprep.subr.mxu0 %v61
  %845 = vmatpush1.msra.mxu0 %v60
  %846 = vmatprep.subr.mxu0 %v59
  %847 = vmatpush1.msra.mxu0 %v58
  %848 = vmatprep.subr.mxu0 %v57
  %849 = vmatpush1.msra.mxu0 %v56
  %850 = vmatprep.subr.mxu0 %v55
  %851 = vmatpush1.msra.mxu0 %v54
  %852 = vmatprep.subr.mxu0 %v53
  %853 = vmatpush1.msra.mxu0 %v52
  %854 = vmatprep.subr.mxu0 %v51
  %855 = vmatpush1.msra.mxu0 %v50
  %856 = vmatprep.subr.mxu0 0.0
  %857 = vmatpush2.msra.mxu0 0.0
  %858 = vmatprep.subr.mxu0 0.0
  %859 = vmatpush2.msra.mxu0 0.0
  %860 = vmatprep.subr.mxu0 0.0
  %861 = vmatpush2.msra.mxu0 0.0
  %862 = vmatprep.subr.mxu0 0.0
  %863 = vmatpush2.msra.mxu0 0.0
  %864 = vmatprep.subr.mxu0 0.0
  %865 = vmatpush2.msra.mxu0 0.0
  %866 = vmatprep.subr.mxu0 0.0
  %867 = vmatpush2.msra.mxu0 0.0
  %868 = vmatprep.subr.mxu0 0.0
  %869 = vmatpush2.msra.mxu0 0.0
  %870 = vmatprep.subr.mxu0 0.0
  %871 = vmatpush2.msra.mxu0 0.0
  %872 = vmatprep.subr.mxu0 0.0
  %873 = vmatpush2.msra.mxu0 0.0
  %874 = vmatprep.subr.mxu0 0.0
  %875 = vmatpush2.msra.mxu0 0.0
  %876 = vmatprep.subr.mxu0 0.0
  %877 = vmatpush2.msra.mxu0 0.0
  %878 = vmatprep.subr.mxu0 0.0
  %879 = vmatpush2.msra.mxu0 0.0
  %880 = vmatprep.subr.mxu0 0.0
  %881 = vmatpush2.msra.mxu0 0.0
  %882 = vmatprep.subr.mxu0 0.0
  %883 = vmatpush2.msra.mxu0 0.0
  %884 = vmatprep.subr.mxu0 0.0
  %885 = vmatpush2.msra.mxu0 0.0
  %886 = vmatprep.subr.mxu0 0.0
  %887 = vmatpush2.msra.mxu0 0.0
  %888 = vmatprep.mubr.f32.mxu0 0.0
  %889 = vmatmul.mubr.f32.gmra.mxu0 %v822
  %v890 = vpop.f32.mrf.mxu0
  %v891 = vadd.f32 0.0, %v890
  %v892 = vpop.f32.mrf.mxu0
  %v893 = vadd.f32 0.0, %v892
  %894 = vdwg.mxu0
  %v897 = vrot.slane %v891, 4
  %v898 = vrot.slane %v893, 4
  %v901 = vadd.f32 %v174, %v897
  %v902 = vadd.f32 %v176, %v898
  %v903 = vxor.u32 %v901, 2147483648
  %v904 = vmul.f32 %v903, 1.442695
  %v905 = vpow.pop %v904
  %v906 = vadd.f32 %v905, 1.0
  %v907 = vrcp.pop %v906
  %v908 = vmul.f32 1.0, %v907
  %v909 = vtanh.pop %v902
  %v910 = vxor.u32 %v902, 2147483648
  %v911 = vmul.f32 %v910, 1.442695
  %v912 = vpow.pop %v911
  %v913 = vadd.f32 %v912, 1.0
  %v914 = vrcp.pop %v913
  %v915 = vmul.f32 1.0, %v914
  %v917 = vrot.slane %v815, 6
  %v919 = vmul.f32 %v908, %v917
  %v920 = vmul.f32 %v908, %v909
  %922 = vrot.lane.b32.xlu0 %v920, 64
  %v923 = vpop.permute.xlu0 %922
  %v925 = vadd.f32 %v919, %v923
  %v926 = vtanh.pop %v925
  %v927 = vmul.f32 %v915, %v926
  %v929 = vrot.slane %v927, 4
  %930 = vrot.lane.b32.xlu0 %v929, 64
  %v931 = vpop.permute.xlu0 %930
  %v932 = vsel %vm94, %v931, 0
  %934 = vmatprep.subr.mxu0 0.0
  %935 = vmatpush1.msra.mxu0 0.0
  %936 = vmatprep.subr.mxu0 0.0
  %937 = vmatpush1.msra.mxu0 0.0
  %938 = vmatprep.subr.mxu0 0.0
  %939 = vmatpush1.msra.mxu0 0.0
  %940 = vmatprep.subr.mxu0 0.0
  %941 = vmatpush1.msra.mxu0 0.0
  %942 = vmatprep.subr.mxu0 0.0
  %943 = vmatpush1.msra.mxu0 0.0
  %944 = vmatprep.subr.mxu0 0.0
  %945 = vmatpush1.msra.mxu0 0.0
  %946 = vmatprep.subr.mxu0 0.0
  %947 = vmatpush1.msra.mxu0 0.0
  %948 = vmatprep.subr.mxu0 0.0
  %949 = vmatpush1.msra.mxu0 0.0
  %950 = vmatprep.subr.mxu0 %v65
  %951 = vmatpush1.msra.mxu0 %v64
  %952 = vmatprep.subr.mxu0 %v63
  %953 = vmatpush1.msra.mxu0 %v62
  %954 = vmatprep.subr.mxu0 %v61
  %955 = vmatpush1.msra.mxu0 %v60
  %956 = vmatprep.subr.mxu0 %v59
  %957 = vmatpush1.msra.mxu0 %v58
  %958 = vmatprep.subr.mxu0 %v57
  %959 = vmatpush1.msra.mxu0 %v56
  %960 = vmatprep.subr.mxu0 %v55
  %961 = vmatpush1.msra.mxu0 %v54
  %962 = vmatprep.subr.mxu0 %v53
  %963 = vmatpush1.msra.mxu0 %v52
  %964 = vmatprep.subr.mxu0 %v51
  %965 = vmatpush1.msra.mxu0 %v50
  %966 = vmatprep.subr.mxu0 0.0
  %967 = vmatpush2.msra.mxu0 0.0
  %968 = vmatprep.subr.mxu0 0.0
  %969 = vmatpush2.msra.mxu0 0.0
  %970 = vmatprep.subr.mxu0 0.0
  %971 = vmatpush2.msra.mxu0 0.0
  %972 = vmatprep.subr.mxu0 0.0
  %973 = vmatpush2.msra.mxu0 0.0
  %974 = vmatprep.subr.mxu0 0.0
  %975 = vmatpush2.msra.mxu0 0.0
  %976 = vmatprep.subr.mxu0 0.0
  %977 = vmatpush2.msra.mxu0 0.0
  %978 = vmatprep.subr.mxu0 0.0
  %979 = vmatpush2.msra.mxu0 0.0
  %980 = vmatprep.subr.mxu0 0.0
  %981 = vmatpush2.msra.mxu0 0.0
  %982 = vmatprep.subr.mxu0 0.0
  %983 = vmatpush2.msra.mxu0 0.0
  %984 = vmatprep.subr.mxu0 0.0
  %985 = vmatpush2.msra.mxu0 0.0
  %986 = vmatprep.subr.mxu0 0.0
  %987 = vmatpush2.msra.mxu0 0.0
  %988 = vmatprep.subr.mxu0 0.0
  %989 = vmatpush2.msra.mxu0 0.0
  %990 = vmatprep.subr.mxu0 0.0
  %991 = vmatpush2.msra.mxu0 0.0
  %992 = vmatprep.subr.mxu0 0.0
  %993 = vmatpush2.msra.mxu0 0.0
  %994 = vmatprep.subr.mxu0 0.0
  %995 = vmatpush2.msra.mxu0 0.0
  %996 = vmatprep.subr.mxu0 0.0
  %997 = vmatpush2.msra.mxu0 0.0
  %998 = vmatprep.mubr.f32.mxu0 0.0
  %999 = vmatmul.mubr.f32.gmra.mxu0 %v932
  %v1000 = vpop.f32.mrf.mxu0
  %v1001 = vadd.f32 0.0, %v1000
  %v1002 = vpop.f32.mrf.mxu0
  %v1003 = vadd.f32 0.0, %v1002
  %1004 = vdwg.mxu0
  %v1007 = vrot.slane %v1001, 2
  %v1008 = vrot.slane %v1003, 2
  %v1011 = vadd.f32 %v174, %v1007
  %v1012 = vadd.f32 %v176, %v1008
  %v1013 = vxor.u32 %v1011, 2147483648
  %v1014 = vmul.f32 %v1013, 1.442695
  %v1015 = vpow.pop %v1014
  %v1016 = vadd.f32 %v1015, 1.0
  %v1017 = vrcp.pop %v1016
  %v1018 = vmul.f32 1.0, %v1017
  %v1019 = vtanh.pop %v1012
  %v1020 = vxor.u32 %v1012, 2147483648
  %v1021 = vmul.f32 %v1020, 1.442695
  %v1022 = vpow.pop %v1021
  %v1023 = vadd.f32 %v1022, 1.0
  %v1024 = vrcp.pop %v1023
  %v1025 = vmul.f32 1.0, %v1024
  %v1027 = vrot.slane %v925, 6
  %v1029 = vmul.f32 %v1018, %v1027
  %v1030 = vmul.f32 %v1018, %v1019
  %1032 = vrot.lane.b32.xlu0 %v1030, 64
  %v1033 = vpop.permute.xlu0 %1032
  %v1035 = vadd.f32 %v1029, %v1033
  %v1036 = vtanh.pop %v1035
  %v1037 = vmul.f32 %v1025, %v1036
  %v1038 = vld [vmem:[%s5] sm:$0x3f]
  %v1039 = vld [vmem:[%s6] sm:$0x1]
  %v1041 = vlaneseq
  %v1042 = vshrl.u32 %v1041, 7
  %v1043 = vsub.s32 0, %v1042
  %v1044 = vrot.slane %v1039, %v1043
  %vm1046 = vcmask 48128
  %v1048 = vsel %vm1046, %v49, 0
  %vm1050 = vcmask 1045504
  %v1052 = vsel %vm1050, %v1038, 0
  %1054 = vmatprep.subr.mxu0 0.0
  %1055 = vmatpush1.msra.mxu0 0.0
  %1056 = vmatprep.subr.mxu0 0.0
  %1057 = vmatpush1.msra.mxu0 0.0
  %1058 = vmatprep.subr.mxu0 0.0
  %1059 = vmatpush1.msra.mxu0 0.0
  %1060 = vmatprep.subr.mxu0 0.0
  %1061 = vmatpush1.msra.mxu0 0.0
  %1062 = vmatprep.subr.mxu0 0.0
  %1063 = vmatpush1.msra.mxu0 0.0
  %1064 = vmatprep.subr.mxu0 0.0
  %1065 = vmatpush1.msra.mxu0 0.0
  %1066 = vmatprep.subr.mxu0 0.0
  %1067 = vmatpush1.msra.mxu0 0.0
  %1068 = vmatprep.subr.mxu0 0.0
  %1069 = vmatpush1.msra.mxu0 0.0
  %1070 = vmatprep.subr.mxu0 0.0
  %1071 = vmatpush1.msra.mxu0 0.0
  %1072 = vmatprep.subr.mxu0 0.0
  %1073 = vmatpush1.msra.mxu0 0.0
  %1074 = vmatprep.subr.mxu0 0.0
  %1075 = vmatpush1.msra.mxu0 0.0
  %1076 = vmatprep.subr.mxu0 0.0
  %1077 = vmatpush1.msra.mxu0 0.0
  %1078 = vmatprep.subr.mxu0 0.0
  %1079 = vmatpush1.msra.mxu0 0.0
  %1080 = vmatprep.subr.mxu0 0.0
  %1081 = vmatpush1.msra.mxu0 0.0
  %1082 = vmatprep.subr.mxu0 0.0
  %1083 = vmatpush1.msra.mxu0 0.0
  %1084 = vmatprep.subr.mxu0 0.0
  %1085 = vmatpush1.msra.mxu0 %v1052
  %1086 = vmatprep.subr.mxu0 0.0
  %1087 = vmatpush2.msra.mxu0 0.0
  %1088 = vmatprep.subr.mxu0 0.0
  %1089 = vmatpush2.msra.mxu0 0.0
  %1090 = vmatprep.subr.mxu0 0.0
  %1091 = vmatpush2.msra.mxu0 0.0
  %1092 = vmatprep.subr.mxu0 0.0
  %1093 = vmatpush2.msra.mxu0 0.0
  %1094 = vmatprep.subr.mxu0 0.0
  %1095 = vmatpush2.msra.mxu0 0.0
  %1096 = vmatprep.subr.mxu0 0.0
  %1097 = vmatpush2.msra.mxu0 0.0
  %1098 = vmatprep.subr.mxu0 0.0
  %1099 = vmatpush2.msra.mxu0 0.0
  %1100 = vmatprep.subr.mxu0 0.0
  %1101 = vmatpush2.msra.mxu0 0.0
  %1102 = vmatprep.subr.mxu0 0.0
  %1103 = vmatpush2.msra.mxu0 0.0
  %1104 = vmatprep.subr.mxu0 0.0
  %1105 = vmatpush2.msra.mxu0 0.0
  %1106 = vmatprep.subr.mxu0 0.0
  %1107 = vmatpush2.msra.mxu0 0.0
  %1108 = vmatprep.subr.mxu0 0.0
  %1109 = vmatpush2.msra.mxu0 0.0
  %1110 = vmatprep.subr.mxu0 0.0
  %1111 = vmatpush2.msra.mxu0 0.0
  %1112 = vmatprep.subr.mxu0 0.0
  %1113 = vmatpush2.msra.mxu0 0.0
  %1114 = vmatprep.subr.mxu0 0.0
  %1115 = vmatpush2.msra.mxu0 0.0
  %1116 = vmatprep.subr.mxu0 0.0
  %1117 = vmatpush2.msra.mxu0 0.0
  %1118 = vmatprep.mubr.f32.mxu0 0.0
  %1119 = vmatmul.mubr.f32.gmra.mxu0 %v1048
  %v1120 = vpop.f32.mrf.mxu0
  %v1121 = vadd.f32 %v1044, %v1120
  %v1122 = vpop.f32.mrf.mxu0
  %1123 = vdwg.mxu0
  %v1124 = vmax.f32 %v1121, 0.0
  %v1125 = vld [vmem:[%s7] sm:$0xff]
  %v1126 = vld [vmem:[%s7 + $0x8] sm:$0xff]
  %v1127 = vld [vmem:[%s7 + $0x10] sm:$0xff]
  %v1128 = vld [vmem:[%s7 + $0x18] sm:$0xff]
  %v1129 = vld [vmem:[%s7 + $0x20] sm:$0xff]
  %v1130 = vld [vmem:[%s7 + $0x28] sm:$0xff]
  %v1131 = vld [vmem:[%s7 + $0x30] sm:$0xff]
  %v1132 = vld [vmem:[%s7 + $0x38] sm:$0xff]
  %v1133 = vld [vmem:[%s8] sm:$0x1]
  %v1135 = vlaneseq
  %v1136 = vshrl.u32 %v1135, 7
  %v1137 = vsub.s32 0, %v1136
  %v1138 = vrot.slane %v1133, %v1137
  %v1141 = vsel %vm94, %v1124, 0
  %1143 = vmatprep.subr.mxu0 0.0
  %1144 = vmatpush1.msra.mxu0 0.0
  %1145 = vmatprep.subr.mxu0 0.0
  %1146 = vmatpush1.msra.mxu0 0.0
  %1147 = vmatprep.subr.mxu0 0.0
  %1148 = vmatpush1.msra.mxu0 0.0
  %1149 = vmatprep.subr.mxu0 0.0
  %1150 = vmatpush1.msra.mxu0 0.0
  %1151 = vmatprep.subr.mxu0 0.0
  %1152 = vmatpush1.msra.mxu0 0.0
  %1153 = vmatprep.subr.mxu0 0.0
  %1154 = vmatpush1.msra.mxu0 0.0
  %1155 = vmatprep.subr.mxu0 0.0
  %1156 = vmatpush1.msra.mxu0 0.0
  %1157 = vmatprep.subr.mxu0 0.0
  %1158 = vmatpush1.msra.mxu0 0.0
  %1159 = vmatprep.subr.mxu0 0.0
  %1160 = vmatpush1.msra.mxu0 %v1132
  %1161 = vmatprep.subr.mxu0 0.0
  %1162 = vmatpush1.msra.mxu0 %v1131
  %1163 = vmatprep.subr.mxu0 0.0
  %1164 = vmatpush1.msra.mxu0 %v1130
  %1165 = vmatprep.subr.mxu0 0.0
  %1166 = vmatpush1.msra.mxu0 %v1129
  %1167 = vmatprep.subr.mxu0 0.0
  %1168 = vmatpush1.msra.mxu0 %v1128
  %1169 = vmatprep.subr.mxu0 0.0
  %1170 = vmatpush1.msra.mxu0 %v1127
  %1171 = vmatprep.subr.mxu0 0.0
  %1172 = vmatpush1.msra.mxu0 %v1126
  %1173 = vmatprep.subr.mxu0 0.0
  %1174 = vmatpush1.msra.mxu0 %v1125
  %1175 = vmatprep.subr.mxu0 0.0
  %1176 = vmatpush2.msra.mxu0 0.0
  %1177 = vmatprep.subr.mxu0 0.0
  %1178 = vmatpush2.msra.mxu0 0.0
  %1179 = vmatprep.subr.mxu0 0.0
  %1180 = vmatpush2.msra.mxu0 0.0
  %1181 = vmatprep.subr.mxu0 0.0
  %1182 = vmatpush2.msra.mxu0 0.0
  %1183 = vmatprep.subr.mxu0 0.0
  %1184 = vmatpush2.msra.mxu0 0.0
  %1185 = vmatprep.subr.mxu0 0.0
  %1186 = vmatpush2.msra.mxu0 0.0
  %1187 = vmatprep.subr.mxu0 0.0
  %1188 = vmatpush2.msra.mxu0 0.0
  %1189 = vmatprep.subr.mxu0 0.0
  %1190 = vmatpush2.msra.mxu0 0.0
  %1191 = vmatprep.subr.mxu0 0.0
  %1192 = vmatpush2.msra.mxu0 0.0
  %1193 = vmatprep.subr.mxu0 0.0
  %1194 = vmatpush2.msra.mxu0 0.0
  %1195 = vmatprep.subr.mxu0 0.0
  %1196 = vmatpush2.msra.mxu0 0.0
  %1197 = vmatprep.subr.mxu0 0.0
  %1198 = vmatpush2.msra.mxu0 0.0
  %1199 = vmatprep.subr.mxu0 0.0
  %1200 = vmatpush2.msra.mxu0 0.0
  %1201 = vmatprep.subr.mxu0 0.0
  %1202 = vmatpush2.msra.mxu0 0.0
  %1203 = vmatprep.subr.mxu0 0.0
  %1204 = vmatpush2.msra.mxu0 0.0
  %1205 = vmatprep.subr.mxu0 0.0
  %1206 = vmatpush2.msra.mxu0 0.0
  %1207 = vmatprep.mubr.f32.mxu0 0.0
  %1208 = vmatmul.mubr.f32.gmra.mxu0 %v1141
  %v1209 = vpop.f32.mrf.mxu0
  %v1210 = vadd.f32 %v1138, %v1209
  %v1211 = vpop.f32.mrf.mxu0
  %1212 = vdwg.mxu0
  %v1213 = vmax.f32 %v1210, 0.0
  %v1214 = vtanh.pop %v1213
  %v1215 = vld [vmem:[%s9] sm:$0xff]
  %v1216 = vld [vmem:[%s9 + $0x8] sm:$0xff]
  %v1217 = vld [vmem:[%s9 + $0x10] sm:$0xff]
  %v1218 = vld [vmem:[%s9 + $0x18] sm:$0xff]
  %v1219 = vld [vmem:[%s9 + $0x20] sm:$0xff]
  %v1220 = vld [vmem:[%s9 + $0x28] sm:$0xff]
  %v1221 = vld [vmem:[%s9 + $0x30] sm:$0xff]
  %v1222 = vld [vmem:[%s9 + $0x38] sm:$0xff]
  %v1223 = vld [vmem:[%s10] sm:$0xff]
  %v1224 = vld [vmem:[%s10 + $0x8] sm:$0xff]
  %v1225 = vld [vmem:[%s10 + $0x10] sm:$0xff]
  %v1226 = vld [vmem:[%s10 + $0x18] sm:$0xff]
  %vm1227 = vcmask 261120
  %v1229 = vsel %vm1227, %v1214, 0
  %1231 = vmatprep.subr.mxu0 0.0
  %1232 = vmatpush1.msra.mxu0 0.0
  %1233 = vmatprep.subr.mxu0 0.0
  %1234 = vmatpush1.msra.mxu0 0.0
  %1235 = vmatprep.subr.mxu0 0.0
  %1236 = vmatpush1.msra.mxu0 0.0
  %1237 = vmatprep.subr.mxu0 0.0
  %1238 = vmatpush1.msra.mxu0 0.0
  %1239 = vmatprep.subr.mxu0 0.0
  %1240 = vmatpush1.msra.mxu0 0.0
  %1241 = vmatprep.subr.mxu0 0.0
  %1242 = vmatpush1.msra.mxu0 0.0
  %1243 = vmatprep.subr.mxu0 0.0
  %1244 = vmatpush1.msra.mxu0 0.0
  %1245 = vmatprep.subr.mxu0 0.0
  %1246 = vmatpush1.msra.mxu0 0.0
  %1247 = vmatprep.subr.mxu0 0.0
  %1248 = vmatpush1.msra.mxu0 0.0
  %1249 = vmatprep.subr.mxu0 0.0
  %1250 = vmatpush1.msra.mxu0 0.0
  %1251 = vmatprep.subr.mxu0 0.0
  %1252 = vmatpush1.msra.mxu0 0.0
  %1253 = vmatprep.subr.mxu0 0.0
  %1254 = vmatpush1.msra.mxu0 0.0
  %1255 = vmatprep.subr.mxu0 0.0
  %1256 = vmatpush1.msra.mxu0 %v1226
  %1257 = vmatprep.subr.mxu0 0.0
  %1258 = vmatpush1.msra.mxu0 %v1225
  %1259 = vmatprep.subr.mxu0 0.0
  %1260 = vmatpush1.msra.mxu0 %v1224
  %1261 = vmatprep.subr.mxu0 0.0
  %1262 = vmatpush1.msra.mxu0 %v1223
  %1263 = vmatprep.subr.mxu0 0.0
  %1264 = vmatpush2.msra.mxu0 0.0
  %1265 = vmatprep.subr.mxu0 0.0
  %1266 = vmatpush2.msra.mxu0 0.0
  %1267 = vmatprep.subr.mxu0 0.0
  %1268 = vmatpush2.msra.mxu0 0.0
  %1269 = vmatprep.subr.mxu0 0.0
  %1270 = vmatpush2.msra.mxu0 0.0
  %1271 = vmatprep.subr.mxu0 0.0
  %1272 = vmatpush2.msra.mxu0 0.0
  %1273 = vmatprep.subr.mxu0 0.0
  %1274 = vmatpush2.msra.mxu0 0.0
  %1275 = vmatprep.subr.mxu0 0.0
  %1276 = vmatpush2.msra.mxu0 0.0
  %1277 = vmatprep.subr.mxu0 0.0
  %1278 = vmatpush2.msra.mxu0 0.0
  %1279 = vmatprep.subr.mxu0 0.0
  %1280 = vmatpush2.msra.mxu0 0.0
  %1281 = vmatprep.subr.mxu0 0.0
  %1282 = vmatpush2.msra.mxu0 0.0
  %1283 = vmatprep.subr.mxu0 0.0
  %1284 = vmatpush2.msra.mxu0 0.0
  %1285 = vmatprep.subr.mxu0 0.0
  %1286 = vmatpush2.msra.mxu0 0.0
  %1287 = vmatprep.subr.mxu0 0.0
  %1288 = vmatpush2.msra.mxu0 0.0
  %1289 = vmatprep.subr.mxu0 0.0
  %1290 = vmatpush2.msra.mxu0 0.0
  %1291 = vmatprep.subr.mxu0 0.0
  %1292 = vmatpush2.msra.mxu0 0.0
  %1293 = vmatprep.subr.mxu0 0.0
  %1294 = vmatpush2.msra.mxu0 0.0
  %1295 = vmatprep.mubr.f32.mxu0 0.0
  %1296 = vmatmul.mubr.f32.gmra.mxu0 %v1229
  %v1297 = vpop.f32.mrf.mxu0
  %v1298 = vadd.f32 0.0, %v1297
  %v1299 = vpop.f32.mrf.mxu0
  %1300 = vdwg.mxu0
  %v1302 = vrot.slane %v1037, 6
  %1303 = vrot.lane.b32.xlu0 %v1302, 64
  %v1304 = vpop.permute.xlu0 %1303
  %v1305 = vsel %vm94, %v1304, 0
  %1307 = vmatprep.subr.mxu0 0.0
  %1308 = vmatpush1.msra.mxu0 0.0
  %1309 = vmatprep.subr.mxu0 0.0
  %1310 = vmatpush1.msra.mxu0 0.0
  %1311 = vmatprep.subr.mxu0 0.0
  %1312 = vmatpush1.msra.mxu0 0.0
  %1313 = vmatprep.subr.mxu0 0.0
  %1314 = vmatpush1.msra.mxu0 0.0
  %1315 = vmatprep.subr.mxu0 0.0
  %1316 = vmatpush1.msra.mxu0 0.0
  %1317 = vmatprep.subr.mxu0 0.0
  %1318 = vmatpush1.msra.mxu0 0.0
  %1319 = vmatprep.subr.mxu0 0.0
  %1320 = vmatpush1.msra.mxu0 0.0
  %1321 = vmatprep.subr.mxu0 0.0
  %1322 = vmatpush1.msra.mxu0 0.0
  %1323 = vmatprep.subr.mxu0 0.0
  %1324 = vmatpush1.msra.mxu0 %v1222
  %1325 = vmatprep.subr.mxu0 0.0
  %1326 = vmatpush1.msra.mxu0 %v1221
  %1327 = vmatprep.subr.mxu0 0.0
  %1328 = vmatpush1.msra.mxu0 %v1220
  %1329 = vmatprep.subr.mxu0 0.0
  %1330 = vmatpush1.msra.mxu0 %v1219
  %1331 = vmatprep.subr.mxu0 0.0
  %1332 = vmatpush1.msra.mxu0 %v1218
  %1333 = vmatprep.subr.mxu0 0.0
  %1334 = vmatpush1.msra.mxu0 %v1217
  %1335 = vmatprep.subr.mxu0 0.0
  %1336 = vmatpush1.msra.mxu0 %v1216
  %1337 = vmatprep.subr.mxu0 0.0
  %1338 = vmatpush1.msra.mxu0 %v1215
  %1339 = vmatprep.subr.mxu0 0.0
  %1340 = vmatpush2.msra.mxu0 0.0
  %1341 = vmatprep.subr.mxu0 0.0
  %1342 = vmatpush2.msra.mxu0 0.0
  %1343 = vmatprep.subr.mxu0 0.0
  %1344 = vmatpush2.msra.mxu0 0.0
  %1345 = vmatprep.subr.mxu0 0.0
  %1346 = vmatpush2.msra.mxu0 0.0
  %1347 = vmatprep.subr.mxu0 0.0
  %1348 = vmatpush2.msra.mxu0 0.0
  %1349 = vmatprep.subr.mxu0 0.0
  %1350 = vmatpush2.msra.mxu0 0.0
  %1351 = vmatprep.subr.mxu0 0.0
  %1352 = vmatpush2.msra.mxu0 0.0
  %1353 = vmatprep.subr.mxu0 0.0
  %1354 = vmatpush2.msra.mxu0 0.0
  %1355 = vmatprep.subr.mxu0 0.0
  %1356 = vmatpush2.msra.mxu0 0.0
  %1357 = vmatprep.subr.mxu0 0.0
  %1358 = vmatpush2.msra.mxu0 0.0
  %1359 = vmatprep.subr.mxu0 0.0
  %1360 = vmatpush2.msra.mxu0 0.0
  %1361 = vmatprep.subr.mxu0 0.0
  %1362 = vmatpush2.msra.mxu0 0.0
  %1363 = vmatprep.subr.mxu0 0.0
  %1364 = vmatpush2.msra.mxu0 0.0
  %1365 = vmatprep.subr.mxu0 0.0
  %1366 = vmatpush2.msra.mxu0 0.0
  %1367 = vmatprep.subr.mxu0 0.0
  %1368 = vmatpush2.msra.mxu0 0.0
  %1369 = vmatprep.subr.mxu0 0.0
  %1370 = vmatpush2.msra.mxu0 0.0
  %1371 = vmatprep.mubr.f32.mxu0 0.0
  %1372 = vmatmul.mubr.f32.gmra.mxu0 %v1305
  %v1373 = vpop.f32.mrf.mxu0
  %v1374 = vadd.f32 %v1298, %v1373
  %v1375 = vpop.f32.mrf.mxu0
  %1376 = vdwg.mxu0
  %v1377 = vld [vmem:[%s11] sm:$0x1]
  %v1379 = vlaneseq
  %v1380 = vshrl.u32 %v1379, 7
  %v1381 = vsub.s32 0, %v1380
  %v1382 = vrot.slane %v1377, %v1381
  %v1384 = vadd.f32 %v1374, %v1382
  %v1385 = vmax.f32 %v1384, 0.0
  %v1386 = vld [vmem:[%s12] sm:$0x1]
  %v1388 = vlaneseq
  %v1389 = vshrl.u32 %v1388, 7
  %v1390 = vsub.s32 0, %v1389
  %v1391 = vrot.slane %v1386, %v1390
  %v1393 = vmul.f32 %v1385, %v1391
  %vm1394 = vcmask 517120
  %v1395 = vsel %vm1394, %v1393, 0.0
  %1396 = vadd.xlane.f32.xlu0 %v1395
  %v1397 = vpop.xlane.xlu0 %1396
  %1399 = vrot.lane.b32.xlu0 %v1393, 64
  %v1400 = vpop.permute.xlu0 %1399
  %v1402 = vsel %vm1394, %v1400, 0.0
  %1403 = vadd.xlane.f32.xlu0 %v1402
  %v1404 = vpop.xlane.xlu0 %1403
  %vm1405 = vcmask 7168
  %v1406 = vsel %vm1405, %v1397, %v1404
  %v1407 = vld [vmem:[%s13] sm:$0x1]
  %v1409 = vlaneseq
  %v1410 = vshrl.u32 %v1409, 7
  %v1411 = vsub.s32 0, %v1410
  %v1412 = vrot.slane %v1407, %v1411
  %v1414 = vadd.f32 %v1406, %v1412
  %v1415 = vtanh.pop %v1414
  %vm1416 = vcmask 9216
  %1417 = vst.msk [vmem:[%s14] sm:$0x3] %vm1416, %v1415
  // Predicated region
  $region58: #{critic_forward.1} parent=0 // pred_check
    _
  $region59: #{critic_forward.1} parent=0 // pred_check_branch
    %1419 = sbr.rel (0) target = $region61
  $region60: #{critic_forward.1} parent=0 // pred_region
    _
  $region61: #{critic_forward.1} parent=0 // pred_fallthru
    _
  // Predicated region
  $region62: #{critic_forward.1} parent=0 // pred_check
    _
  $region63: #{critic_forward.1} parent=0 // pred_check_branch
    %1421 = sbr.rel (0) target = $region65
  $region64: #{critic_forward.1} parent=0 // pred_region
    _
  $region65: #{critic_forward.1} parent=0 // pred_fallthru
    _

</llo_original>
